<compile_context>
chip_gen: v6e
topology: v6e:2x2x1
jax: 0.10.0
libtpu: 0.0.40
codegen_flags: <defaults>
</compile_context>

<pallas_src>
import math
import numpy as np
import jax
import jax.numpy as jnp
from jax.experimental import pallas as pl
from jax.experimental.pallas import tpu as pltpu

# ---- small, module-consistent dims ----
B, S, D = 2, 8, 32          # batch, seq, hidden
NUM_HEADS, HEAD_DIM = 4, 8  # D = NUM_HEADS * HEAD_DIM
INTER = 64                  # MLP intermediate
G = 5 * NUM_HEADS           # per-head projection groups: q | k | v | q@P | k@P
EPS = 1e-6
ROPE_BASE = 10000.0
NEG_INF = -1e30
SCALE = 1.0 / math.sqrt(HEAD_DIM)


# ---------------- Pallas kernel (one grid step per batch element) ----------------
def decoder_layer_kernel(h_ref, attn_ref, cos_ref, sin_ref,
                         ln1_ref, wqkv_ref, wo_ref,
                         ln2_ref, wgu_ref, wd_ref, out_ref):
    x = h_ref[...]                                        # [S, D] f32 residual path

    # --- causal + key-padding additive mask for this batch (built in-kernel) ---
    row = jax.lax.broadcasted_iota(jnp.int32, (S, S), 0)
    col = jax.lax.broadcasted_iota(jnp.int32, (S, S), 1)
    keep = (row >= col) & (attn_ref[...] > 0.5)           # [1,S] key padding broadcast
    mask = jnp.where(keep, jnp.float32(0.0), jnp.float32(NEG_INF))[None]   # [1,S,S]

    # --- input RMSNorm (f32 statistics / elementwise) ---
    var = jnp.mean(x * x, axis=-1, keepdims=True)
    hn = (x * jax.lax.rsqrt(var + EPS) * ln1_ref[...]).astype(jnp.bfloat16)

    # --- fused head-batched projection: q | k | v | rot(q) | rot(k) ---
    # rotate_half is pre-folded into the weights (Wq@P, Wk@P) -> MXU does the
    # "rotation"; no lane shuffles anywhere.
    hb = jnp.broadcast_to(hn[None], (G, S, D))            # bf16, broadcast over groups
    proj = jnp.einsum('gsd,gdk->gsk', hb, wqkv_ref[...],
                      preferred_element_type=jnp.float32)  # [G, S, hd] f32
    q_lin = proj[0 * NUM_HEADS:1 * NUM_HEADS]
    k_lin = proj[1 * NUM_HEADS:2 * NUM_HEADS]
    v     = proj[2 * NUM_HEADS:3 * NUM_HEADS]
    q_rot = proj[3 * NUM_HEADS:4 * NUM_HEADS]
    k_rot = proj[4 * NUM_HEADS:]

    # --- RoPE; cos/sin are [S, hd], broadcast over heads; 1/sqrt(hd) folded in ---
    cos = cos_ref[...][None]                               # [1, S, hd]
    sin = sin_ref[...][None]
    q = ((q_lin * cos + q_rot * sin) * SCALE).astype(jnp.bfloat16)   # [H, S, hd]
    k = (k_lin * cos + k_rot * sin).astype(jnp.bfloat16)
    vb = v.astype(jnp.bfloat16)

    # --- head-batched causal attention: one scores matmul, one softmax pass ---
    s = jnp.einsum('hqd,hkd->hqk', q, k,
                   preferred_element_type=jnp.float32)     # [H, S, S] f32
    s = s + mask
    s = s - jnp.max(s, axis=-1, keepdims=True)
    p = jnp.exp(s)
    p = p * pl.reciprocal(jnp.sum(p, axis=-1, keepdims=True), approx=True)
    o = jnp.einsum('hqk,hkd->hqd', p.astype(jnp.bfloat16), vb,
                   preferred_element_type=jnp.float32)     # [H, S, hd] f32

    # --- o_proj as head-batched matmul + head reduction (no lane concat) ---
    per_head = jnp.einsum('hsd,hdk->hsk', o.astype(jnp.bfloat16), wo_ref[...],
                          preferred_element_type=jnp.float32)        # [H, S, D]
    x = x + jnp.sum(per_head, axis=0)                                # [S, D]

    # --- post-attention RMSNorm + SwiGLU MLP (fused gate|up, 128-lane dense) ---
    var2 = jnp.mean(x * x, axis=-1, keepdims=True)
    hn2 = (x * jax.lax.rsqrt(var2 + EPS) * ln2_ref[...]).astype(jnp.bfloat16)
    gu = jnp.dot(hn2, wgu_ref[...], preferred_element_type=jnp.float32)  # [S, 2*INTER]
    g = gu[:, :INTER]
    u = gu[:, INTER:]
    act = (g * jax.nn.sigmoid(g) * u).astype(jnp.bfloat16)
    out_ref[...] = x + jnp.dot(act, wd_ref[...], preferred_element_type=jnp.float32)


# ---------------- host-side prep (done ONCE, outside the jitted forward) ----------------
def rotary_cos_sin(seq_len, head_dim, base=ROPE_BASE):
    # position ids are arange(seq) broadcast over batch (build_position_ids)
    inv_freq = 1.0 / (base ** (jnp.arange(0, head_dim, 2, dtype=jnp.float32) / head_dim))
    pos = jnp.arange(seq_len, dtype=jnp.float32)
    freqs = jnp.outer(pos, inv_freq)                   # [S, hd/2]
    emb = jnp.concatenate([freqs, freqs], axis=-1)     # [S, hd]
    return jnp.cos(emb), jnp.sin(emb)


def prepare_fused_params(params):
    """Fold rotate_half into the weights and pre-fuse/cast everything once."""
    half = HEAD_DIM // 2
    P = np.zeros((D, D), np.float32)                   # x @ P == rotate_half(x)
    for h in range(NUM_HEADS):
        lo = h * HEAD_DIM
        idx = np.arange(half)
        P[lo + half + idx, lo + idx] = -1.0            # out[:half] = -in[half:]
        P[lo + idx, lo + half + idx] = 1.0             # out[half:] =  in[:half]
    P = jnp.asarray(P)

    wq, wk, wv = params["wq"], params["wk"], params["wv"]
    # fused [D, 5D] -> head-batched [G, D, hd]; groups ordered q|k|v|q@P|k@P, head-major
    wcat = jnp.concatenate([wq, wk, wv, wq @ P, wk @ P], axis=1)
    wqkv3 = wcat.reshape(D, G, HEAD_DIM).transpose(1, 0, 2).astype(jnp.bfloat16)
    wo3 = params["wo"].reshape(NUM_HEADS, HEAD_DIM, D).astype(jnp.bfloat16)
    wgu = jnp.concatenate([params["wg"], params["wu"]], axis=1).astype(jnp.bfloat16)
    wd = params["wd"].astype(jnp.bfloat16)
    cos, sin = rotary_cos_sin(S, HEAD_DIM)             # [S, hd] only (no B/H tiling)
    return dict(ln1=params["ln1"], ln2=params["ln2"], wqkv3=wqkv3, wo3=wo3,
                wgu=wgu, wd=wd, cos=cos, sin=sin)


# ---------------- pallas_call wrapper ----------------
def decoder_layer_pipe_forward(hidden, attn, labels, fp):
    attn3 = attn.reshape(B, 1, S).astype(jnp.float32)

    flops = B * (2 * G * S * D * HEAD_DIM            # fused projection
                 + 4 * NUM_HEADS * S * S * HEAD_DIM   # scores + PV
                 + 2 * NUM_HEADS * S * HEAD_DIM * D   # o_proj
                 + 2 * S * D * 2 * INTER              # gate|up
                 + 2 * S * INTER * D)                 # down
    trans = B * (NUM_HEADS * S * S + NUM_HEADS * S + S * INTER + 2 * S)
    bytes_accessed = (2 * B * S * D * 4 + B * S * 4 + 2 * S * HEAD_DIM * 4 + 4 * D * 4
                      + 2 * (G * D * HEAD_DIM + NUM_HEADS * HEAD_DIM * D
                             + D * 2 * INTER + INTER * D))

    hidden_out = pl.pallas_call(
        decoder_layer_kernel,
        out_shape=jax.ShapeDtypeStruct((B, S, D), jnp.float32),
        grid=(B,),
        in_specs=[
            pl.BlockSpec((None, S, D), lambda b: (b, 0, 0)),          # hidden (per batch)
            pl.BlockSpec((None, 1, S), lambda b: (b, 0, 0)),          # attention mask row
            pl.BlockSpec((S, HEAD_DIM), lambda b: (0, 0)),            # cos (resident)
            pl.BlockSpec((S, HEAD_DIM), lambda b: (0, 0)),            # sin (resident)
            pl.BlockSpec((1, D), lambda b: (0, 0)),                   # ln1
            pl.BlockSpec((G, D, HEAD_DIM), lambda b: (0, 0, 0)),      # fused qkv+rot weight
            pl.BlockSpec((NUM_HEADS, HEAD_DIM, D), lambda b: (0, 0, 0)),  # o_proj weight
            pl.BlockSpec((1, D), lambda b: (0, 0)),                   # ln2
            pl.BlockSpec((D, 2 * INTER), lambda b: (0, 0)),           # gate|up weight
            pl.BlockSpec((INTER, D), lambda b: (0, 0)),               # down weight
        ],
        out_specs=pl.BlockSpec((None, S, D), lambda b: (b, 0, 0)),
        compiler_params=pltpu.CompilerParams(
            dimension_semantics=("parallel",),        # 2 TCs on v7x; cheap on v5e/v6e
            vmem_limit_bytes=32 * 1024 * 1024),       # re-size per generation at real dims
        cost_estimate=pl.CostEstimate(flops=flops, transcendentals=trans,
                                      bytes_accessed=bytes_accessed),
    )(hidden, attn3, fp["cos"], fp["sin"], fp["ln1"], fp["wqkv3"], fp["wo3"],
      fp["ln2"], fp["wgu"], fp["wd"])

    # DecoderLayerPipe returns the tuple unchanged except hidden
    # TODO(synk): attn.requires_grad_() is autograd-only bookkeeping; no forward effect.
    return hidden_out, attn, labels


# ---------------- pure-JAX f32 reference (same math as the PyTorch module) ----------------
def reference_forward(hidden, attn, params):
    cos, sin = rotary_cos_sin(S, HEAD_DIM)
    cos_f = jnp.tile(cos, (1, NUM_HEADS))
    sin_f = jnp.tile(sin, (1, NUM_HEADS))
    causal = jnp.tril(jnp.ones((S, S), dtype=bool))

    def rot_half(t):
        t3 = t.reshape(t.shape[0], NUM_HEADS, HEAD_DIM)
        r = jnp.concatenate([-t3[..., HEAD_DIM // 2:], t3[..., :HEAD_DIM // 2]], axis=-1)
        return r.reshape(t.shape)

    def one(x, am):
        hn = x * jax.lax.rsqrt(jnp.mean(x * x, -1, keepdims=True) + EPS) * params["ln1"][0]
        q = hn @ params["wq"]; k = hn @ params["wk"]; v = hn @ params["wv"]
        q = q * cos_f + rot_half(q) * sin_f
        k = k * cos_f + rot_half(k) * sin_f
        allowed = causal & am.astype(bool)[None, :]
        m = jnp.where(allowed, 0.0, NEG_INF)
        outs = []
        for h in range(NUM_HEADS):
            sl = slice(h * HEAD_DIM, (h + 1) * HEAD_DIM)
            s = q[:, sl] @ k[:, sl].T * SCALE + m
            p = jax.nn.softmax(s, axis=-1)
            outs.append(p @ v[:, sl])
        x = x + jnp.concatenate(outs, -1) @ params["wo"]
        hn2 = x * jax.lax.rsqrt(jnp.mean(x * x, -1, keepdims=True) + EPS) * params["ln2"][0]
        g = hn2 @ params["wg"]; u = hn2 @ params["wu"]
        return x + (g * jax.nn.sigmoid(g) * u) @ params["wd"]

    return jnp.stack([one(hidden[b], attn[b]) for b in range(B)])


# ---------------- main ----------------
if __name__ == "__main__":
    key = jax.random.PRNGKey(0)
    ks = jax.random.split(key, 10)
    scale = 0.02
    params = {
        "ln1": jnp.ones((1, D), jnp.float32),
        "ln2": jnp.ones((1, D), jnp.float32),
        "wq": scale * jax.random.normal(ks[0], (D, D), jnp.float32),
        "wk": scale * jax.random.normal(ks[1], (D, D), jnp.float32),
        "wv": scale * jax.random.normal(ks[2], (D, D), jnp.float32),
        "wo": scale * jax.random.normal(ks[3], (D, D), jnp.float32),
        "wg": scale * jax.random.normal(ks[4], (D, INTER), jnp.float32),
        "wu": scale * jax.random.normal(ks[5], (D, INTER), jnp.float32),
        "wd": scale * jax.random.normal(ks[6], (INTER, D), jnp.float32),
    }

    hidden = jax.random.normal(ks[7], (B, S, D), jnp.float32)
    # 2D attention mask (1 = attend, 0 = pad); batch 1 has 2 padded tail tokens
    attn = jnp.ones((B, S), jnp.float32).at[1, -2:].set(0.0)
    labels = jax.random.randint(ks[8], (B, S), 0, 100, jnp.int32)

    fused = prepare_fused_params(params)   # one-time weight fusion / rotation-fold / cast
    fwd = jax.jit(lambda h, a, l: decoder_layer_pipe_forward(h, a, l, fused))
    out_hidden, out_attn, out_labels = fwd(hidden, attn, labels)
    jax.block_until_ready(out_hidden)

    ref = reference_forward(hidden, attn, params)
    assert bool(jnp.all(jnp.isfinite(out_hidden)))
    assert bool(jnp.allclose(out_hidden, ref, rtol=2e-2, atol=2e-2))
    assert out_hidden.shape == (B, S, D)
    assert out_attn.shape == (B, S) and out_labels.shape == (B, S)

    print("KERNEL_OK")
</pallas_src>

<mosaic_0001>
module attributes {stable_mosaic.version = 11 : i64} {
  func.func @decoder_layer_kernel(%arg0: i32, %arg1: memref<1x8x32xf32, #tpu.memory_space<vmem>>, %arg2: memref<1x1x8xf32, #tpu.memory_space<vmem>>, %arg3: memref<8x8xf32, #tpu.memory_space<vmem>>, %arg4: memref<8x8xf32, #tpu.memory_space<vmem>>, %arg5: memref<1x32xf32, #tpu.memory_space<vmem>>, %arg6: memref<20x32x8xbf16, #tpu.memory_space<vmem>>, %arg7: memref<4x8x32xbf16, #tpu.memory_space<vmem>>, %arg8: memref<1x32xf32, #tpu.memory_space<vmem>>, %arg9: memref<32x128xbf16, #tpu.memory_space<vmem>>, %arg10: memref<64x32xbf16, #tpu.memory_space<vmem>>, %arg11: memref<1x8x32xf32, #tpu.memory_space<vmem>>) attributes {dimension_semantics = [#tpu.dimension_semantics<parallel>], iteration_bounds = array<i64: 2>, scalar_prefetch = 0 : i64, scratch_operands = 0 : i64, tpu.core_type = #tpu.core_type<tc>, window_params = [{transform_indices = @transform_0, window_bounds = array<i64: 1, 8, 32>}, {transform_indices = @transform_1, window_bounds = array<i64: 1, 1, 8>}, {pipeline_mode = #tpu.pipeline_mode<synchronous>, transform_indices = @transform_2, window_bounds = array<i64: 8, 8>}, {pipeline_mode = #tpu.pipeline_mode<synchronous>, transform_indices = @transform_3, window_bounds = array<i64: 8, 8>}, {pipeline_mode = #tpu.pipeline_mode<synchronous>, transform_indices = @transform_4, window_bounds = array<i64: 1, 32>}, {pipeline_mode = #tpu.pipeline_mode<synchronous>, transform_indices = @transform_5, window_bounds = array<i64: 20, 32, 8>}, {pipeline_mode = #tpu.pipeline_mode<synchronous>, transform_indices = @transform_6, window_bounds = array<i64: 4, 8, 32>}, {pipeline_mode = #tpu.pipeline_mode<synchronous>, transform_indices = @transform_7, window_bounds = array<i64: 1, 32>}, {pipeline_mode = #tpu.pipeline_mode<synchronous>, transform_indices = @transform_8, window_bounds = array<i64: 32, 128>}, {pipeline_mode = #tpu.pipeline_mode<synchronous>, transform_indices = @transform_9, window_bounds = array<i64: 64, 32>}, {transform_indices = @transform_10, window_bounds = array<i64: 1, 8, 32>}]} {
    %c0 = arith.constant 0 : index
    %c0_0 = arith.constant 0 : index
    %c0_1 = arith.constant 0 : index
    %0 = vector.load %arg1[%c0, %c0_0, %c0_1] : memref<1x8x32xf32, #tpu.memory_space<vmem>>, vector<1x8x32xf32>
    %1 = vector.shape_cast %0 : vector<1x8x32xf32> to vector<8x32xf32>
    %2 = tpu.iota {dimensions = array<i32: 0>} : vector<8x8xi32>
    %3 = tpu.iota {dimensions = array<i32: 1>} : vector<8x8xi32>
    %4 = arith.cmpi sge, %2, %3 : vector<8x8xi32>
    %c0_2 = arith.constant 0 : index
    %c0_3 = arith.constant 0 : index
    %c0_4 = arith.constant 0 : index
    %5 = vector.load %arg2[%c0_2, %c0_3, %c0_4] : memref<1x1x8xf32, #tpu.memory_space<vmem>>, vector<1x1x8xf32>
    %6 = vector.shape_cast %5 : vector<1x1x8xf32> to vector<1x8xf32>
    %cst = arith.constant 5.000000e-01 : f32
    %7 = vector.broadcast %cst : f32 to vector<1x8xf32>
    %8 = arith.cmpf ogt, %6, %7 : vector<1x8xf32>
    %9 = vector.broadcast %8 : vector<1x8xi1> to vector<8x8xi1>
    %10 = arith.andi %4, %9 : vector<8x8xi1>
    %cst_5 = arith.constant 0.000000e+00 : f32
    %cst_6 = arith.constant -1.000000e+30 : f32
    %11 = vector.broadcast %cst_5 : f32 to vector<8x8xf32>
    %12 = vector.broadcast %cst_6 : f32 to vector<8x8xf32>
    %13 = arith.select %10, %11, %12 : vector<8x8xi1>, vector<8x8xf32>
    %14 = vector.shape_cast %13 : vector<8x8xf32> to vector<1x8x8xf32>
    %15 = arith.mulf %1, %1 : vector<8x32xf32>
    %cst_7 = arith.constant dense<0.000000e+00> : vector<8xf32>
    %16 = vector.multi_reduction <add>, %15, %cst_7 [1] : vector<8x32xf32> to vector<8xf32>
    %17 = vector.shape_cast %16 : vector<8xf32> to vector<8x1xf32>
    %cst_8 = arith.constant 3.200000e+01 : f32
    %18 = vector.broadcast %cst_8 : f32 to vector<8x1xf32>
    %19 = arith.divf %17, %18 : vector<8x1xf32>
    %cst_9 = arith.constant 9.99999997E-7 : f32
    %20 = vector.broadcast %cst_9 : f32 to vector<8x1xf32>
    %21 = arith.addf %19, %20 : vector<8x1xf32>
    %22 = math.rsqrt %21 : vector<8x1xf32>
    %23 = vector.broadcast %22 : vector<8x1xf32> to vector<8x32xf32>
    %24 = arith.mulf %1, %23 : vector<8x32xf32>
    %c0_10 = arith.constant 0 : index
    %c0_11 = arith.constant 0 : index
    %25 = vector.load %arg5[%c0_10, %c0_11] : memref<1x32xf32, #tpu.memory_space<vmem>>, vector<1x32xf32>
    %26 = vector.broadcast %25 : vector<1x32xf32> to vector<8x32xf32>
    %27 = arith.mulf %24, %26 : vector<8x32xf32>
    %28 = arith.truncf %27 : vector<8x32xf32> to vector<8x32xbf16>
    %29 = vector.shape_cast %28 : vector<8x32xbf16> to vector<1x8x32xbf16>
    %30 = vector.shape_cast %29 : vector<1x8x32xbf16> to vector<1x8x32xbf16>
    %31 = vector.broadcast %30 : vector<1x8x32xbf16> to vector<20x8x32xbf16>
    %c0_12 = arith.constant 0 : index
    %c0_13 = arith.constant 0 : index
    %c0_14 = arith.constant 0 : index
    %32 = vector.load %arg6[%c0_12, %c0_13, %c0_14] : memref<20x32x8xbf16, #tpu.memory_space<vmem>>, vector<20x32x8xbf16>
    "tpu.trace_start"() <{level = 10 : i32, message = "gsd,gdk->gsk"}> : () -> ()
    %cst_15 = arith.constant dense<0.000000e+00> : vector<20x8x8xf32>
    %33 = tpu.matmul %31, %32, %cst_15 {dimension_numbers = #tpu.dot_dimension_numbers<[2], [1], [1], [2], [0, 0, 0, 1, 1, 2], [0], [0]>} : vector<20x8x32xbf16>, vector<20x32x8xbf16>, vector<20x8x8xf32> -> vector<20x8x8xf32>
    "tpu.trace_stop"() : () -> ()
    %34 = vector.extract_strided_slice %33 {offsets = [0, 0, 0], sizes = [4, 8, 8], strides = [1, 1, 1]} : vector<20x8x8xf32> to vector<4x8x8xf32>
    %35 = vector.extract_strided_slice %33 {offsets = [4, 0, 0], sizes = [4, 8, 8], strides = [1, 1, 1]} : vector<20x8x8xf32> to vector<4x8x8xf32>
    %36 = vector.extract_strided_slice %33 {offsets = [8, 0, 0], sizes = [4, 8, 8], strides = [1, 1, 1]} : vector<20x8x8xf32> to vector<4x8x8xf32>
    %37 = vector.extract_strided_slice %33 {offsets = [12, 0, 0], sizes = [4, 8, 8], strides = [1, 1, 1]} : vector<20x8x8xf32> to vector<4x8x8xf32>
    %38 = vector.extract_strided_slice %33 {offsets = [16, 0, 0], sizes = [4, 8, 8], strides = [1, 1, 1]} : vector<20x8x8xf32> to vector<4x8x8xf32>
    %c0_16 = arith.constant 0 : index
    %c0_17 = arith.constant 0 : index
    %39 = vector.load %arg3[%c0_16, %c0_17] : memref<8x8xf32, #tpu.memory_space<vmem>>, vector<8x8xf32>
    %40 = vector.shape_cast %39 : vector<8x8xf32> to vector<1x8x8xf32>
    %c0_18 = arith.constant 0 : index
    %c0_19 = arith.constant 0 : index
    %41 = vector.load %arg4[%c0_18, %c0_19] : memref<8x8xf32, #tpu.memory_space<vmem>>, vector<8x8xf32>
    %42 = vector.shape_cast %41 : vector<8x8xf32> to vector<1x8x8xf32>
    %43 = vector.broadcast %40 : vector<1x8x8xf32> to vector<4x8x8xf32>
    %44 = arith.mulf %34, %43 : vector<4x8x8xf32>
    %45 = vector.broadcast %42 : vector<1x8x8xf32> to vector<4x8x8xf32>
    %46 = arith.mulf %37, %45 : vector<4x8x8xf32>
    %47 = arith.addf %44, %46 : vector<4x8x8xf32>
    %cst_20 = arith.constant 0.353553385 : f32
    %48 = vector.broadcast %cst_20 : f32 to vector<4x8x8xf32>
    %49 = arith.mulf %47, %48 : vector<4x8x8xf32>
    %50 = arith.truncf %49 : vector<4x8x8xf32> to vector<4x8x8xbf16>
    %51 = vector.broadcast %40 : vector<1x8x8xf32> to vector<4x8x8xf32>
    %52 = arith.mulf %35, %51 : vector<4x8x8xf32>
    %53 = vector.broadcast %42 : vector<1x8x8xf32> to vector<4x8x8xf32>
    %54 = arith.mulf %38, %53 : vector<4x8x8xf32>
    %55 = arith.addf %52, %54 : vector<4x8x8xf32>
    %56 = arith.truncf %55 : vector<4x8x8xf32> to vector<4x8x8xbf16>
    %57 = arith.truncf %36 : vector<4x8x8xf32> to vector<4x8x8xbf16>
    "tpu.trace_start"() <{level = 10 : i32, message = "hqd,hkd->hqk"}> : () -> ()
    %cst_21 = arith.constant dense<0.000000e+00> : vector<4x8x8xf32>
    %58 = tpu.matmul %50, %56, %cst_21 {dimension_numbers = #tpu.dot_dimension_numbers<[2], [2], [1], [1], [0, 0, 0, 1, 1, 1], [0], [0]>} : vector<4x8x8xbf16>, vector<4x8x8xbf16>, vector<4x8x8xf32> -> vector<4x8x8xf32>
    "tpu.trace_stop"() : () -> ()
    %59 = vector.broadcast %14 : vector<1x8x8xf32> to vector<4x8x8xf32>
    %60 = arith.addf %58, %59 : vector<4x8x8xf32>
    %cst_22 = arith.constant dense<0xFF800000> : vector<4x8xf32>
    %61 = vector.multi_reduction <maximumf>, %60, %cst_22 [2] : vector<4x8x8xf32> to vector<4x8xf32>
    %62 = vector.shape_cast %61 : vector<4x8xf32> to vector<4x8x1xf32>
    %63 = vector.broadcast %62 : vector<4x8x1xf32> to vector<4x8x8xf32>
    %64 = arith.subf %60, %63 : vector<4x8x8xf32>
    %65 = math.exp %64 : vector<4x8x8xf32>
    %cst_23 = arith.constant dense<0.000000e+00> : vector<4x8xf32>
    %66 = vector.multi_reduction <add>, %65, %cst_23 [2] : vector<4x8x8xf32> to vector<4x8xf32>
    %67 = vector.shape_cast %66 : vector<4x8xf32> to vector<4x8x1xf32>
    %68 = tpu.reciprocal %67 {approx = true} : vector<4x8x1xf32> -> vector<4x8x1xf32>
    %69 = vector.broadcast %68 : vector<4x8x1xf32> to vector<4x8x8xf32>
    %70 = arith.mulf %65, %69 : vector<4x8x8xf32>
    %71 = arith.truncf %70 : vector<4x8x8xf32> to vector<4x8x8xbf16>
    "tpu.trace_start"() <{level = 10 : i32, message = "hqk,hkd->hqd"}> : () -> ()
    %cst_24 = arith.constant dense<0.000000e+00> : vector<4x8x8xf32>
    %72 = tpu.matmul %71, %57, %cst_24 {dimension_numbers = #tpu.dot_dimension_numbers<[2], [1], [1], [2], [0, 0, 0, 1, 1, 2], [0], [0]>} : vector<4x8x8xbf16>, vector<4x8x8xbf16>, vector<4x8x8xf32> -> vector<4x8x8xf32>
    "tpu.trace_stop"() : () -> ()
    %73 = arith.truncf %72 : vector<4x8x8xf32> to vector<4x8x8xbf16>
    %c0_25 = arith.constant 0 : index
    %c0_26 = arith.constant 0 : index
    %c0_27 = arith.constant 0 : index
    %74 = vector.load %arg7[%c0_25, %c0_26, %c0_27] : memref<4x8x32xbf16, #tpu.memory_space<vmem>>, vector<4x8x32xbf16>
    "tpu.trace_start"() <{level = 10 : i32, message = "hsd,hdk->hsk"}> : () -> ()
    %cst_28 = arith.constant dense<0.000000e+00> : vector<4x8x32xf32>
    %75 = tpu.matmul %73, %74, %cst_28 {dimension_numbers = #tpu.dot_dimension_numbers<[2], [1], [1], [2], [0, 0, 0, 1, 1, 2], [0], [0]>} : vector<4x8x8xbf16>, vector<4x8x32xbf16>, vector<4x8x32xf32> -> vector<4x8x32xf32>
    "tpu.trace_stop"() : () -> ()
    %cst_29 = arith.constant dense<0.000000e+00> : vector<8x32xf32>
    %76 = vector.multi_reduction <add>, %75, %cst_29 [0] : vector<4x8x32xf32> to vector<8x32xf32>
    %77 = arith.addf %1, %76 : vector<8x32xf32>
    %78 = arith.mulf %77, %77 : vector<8x32xf32>
    %cst_30 = arith.constant dense<0.000000e+00> : vector<8xf32>
    %79 = vector.multi_reduction <add>, %78, %cst_30 [1] : vector<8x32xf32> to vector<8xf32>
    %80 = vector.shape_cast %79 : vector<8xf32> to vector<8x1xf32>
    %cst_31 = arith.constant 3.200000e+01 : f32
    %81 = vector.broadcast %cst_31 : f32 to vector<8x1xf32>
    %82 = arith.divf %80, %81 : vector<8x1xf32>
    %cst_32 = arith.constant 9.99999997E-7 : f32
    %83 = vector.broadcast %cst_32 : f32 to vector<8x1xf32>
    %84 = arith.addf %82, %83 : vector<8x1xf32>
    %85 = math.rsqrt %84 : vector<8x1xf32>
    %86 = vector.broadcast %85 : vector<8x1xf32> to vector<8x32xf32>
    %87 = arith.mulf %77, %86 : vector<8x32xf32>
    %c0_33 = arith.constant 0 : index
    %c0_34 = arith.constant 0 : index
    %88 = vector.load %arg8[%c0_33, %c0_34] : memref<1x32xf32, #tpu.memory_space<vmem>>, vector<1x32xf32>
    %89 = vector.broadcast %88 : vector<1x32xf32> to vector<8x32xf32>
    %90 = arith.mulf %87, %89 : vector<8x32xf32>
    %91 = arith.truncf %90 : vector<8x32xf32> to vector<8x32xbf16>
    %c0_35 = arith.constant 0 : index
    %c0_36 = arith.constant 0 : index
    %92 = vector.load %arg9[%c0_35, %c0_36] : memref<32x128xbf16, #tpu.memory_space<vmem>>, vector<32x128xbf16>
    %cst_37 = arith.constant dense<0.000000e+00> : vector<8x128xf32>
    %93 = tpu.matmul %91, %92, %cst_37 {dimension_numbers = #tpu.dot_dimension_numbers<[1], [0], [0], [1], [0, 0, 1, 1], [], []>} : vector<8x32xbf16>, vector<32x128xbf16>, vector<8x128xf32> -> vector<8x128xf32>
    %94 = vector.extract_strided_slice %93 {offsets = [0, 0], sizes = [8, 64], strides = [1, 1]} : vector<8x128xf32> to vector<8x64xf32>
    %95 = vector.extract_strided_slice %93 {offsets = [0, 64], sizes = [8, 64], strides = [1, 1]} : vector<8x128xf32> to vector<8x64xf32>
    %96 = arith.negf %94 : vector<8x64xf32>
    %97 = math.exp %96 : vector<8x64xf32>
    %cst_38 = arith.constant 1.000000e+00 : f32
    %98 = vector.broadcast %cst_38 : f32 to vector<8x64xf32>
    %99 = arith.addf %98, %97 : vector<8x64xf32>
    %100 = arith.divf %98, %99 : vector<8x64xf32>
    %101 = arith.mulf %94, %100 : vector<8x64xf32>
    %102 = arith.mulf %101, %95 : vector<8x64xf32>
    %103 = arith.truncf %102 : vector<8x64xf32> to vector<8x64xbf16>
    %c0_39 = arith.constant 0 : index
    %c0_40 = arith.constant 0 : index
    %104 = vector.load %arg10[%c0_39, %c0_40] : memref<64x32xbf16, #tpu.memory_space<vmem>>, vector<64x32xbf16>
    %cst_41 = arith.constant dense<0.000000e+00> : vector<8x32xf32>
    %105 = tpu.matmul %103, %104, %cst_41 {dimension_numbers = #tpu.dot_dimension_numbers<[1], [0], [0], [1], [0, 0, 1, 1], [], []>} : vector<8x64xbf16>, vector<64x32xbf16>, vector<8x32xf32> -> vector<8x32xf32>
    %106 = arith.addf %77, %105 : vector<8x32xf32>
    %c0_42 = arith.constant 0 : index
    %c0_43 = arith.constant 0 : index
    %c0_44 = arith.constant 0 : index
    %107 = vector.load %arg11[%c0_42, %c0_43, %c0_44] : memref<1x8x32xf32, #tpu.memory_space<vmem>>, vector<1x8x32xf32>
    %108 = vector.shape_cast %107 : vector<1x8x32xf32> to vector<8x32xf32>
    %109 = vector.shape_cast %106 : vector<8x32xf32> to vector<1x8x32xf32>
    tpu.vector_store %arg11[%c0_42, %c0_43, %c0_44], %109 {strides = array<i32>} : memref<1x8x32xf32, #tpu.memory_space<vmem>>, vector<1x8x32xf32>,
    return
  }
  func.func @transform_0(%arg0: i32) -> (i32, i32, i32) {
    %c0_i32 = arith.constant 0 : i32
    %c0_i32_0 = arith.constant 0 : i32
    %c0_i32_1 = arith.constant 0 : i32
    return %arg0, %c0_i32, %c0_i32_0 : i32, i32, i32
  }
  func.func @transform_1(%arg0: i32) -> (i32, i32, i32) {
    %c0_i32 = arith.constant 0 : i32
    %c0_i32_0 = arith.constant 0 : i32
    %c0_i32_1 = arith.constant 0 : i32
    return %arg0, %c0_i32, %c0_i32_0 : i32, i32, i32
  }
  func.func @transform_2(%arg0: i32) -> (i32, i32) {
    %c0_i32 = arith.constant 0 : i32
    %c0_i32_0 = arith.constant 0 : i32
    %c0_i32_1 = arith.constant 0 : i32
    return %c0_i32, %c0_i32_0 : i32, i32
  }
  func.func @transform_3(%arg0: i32) -> (i32, i32) {
    %c0_i32 = arith.constant 0 : i32
    %c0_i32_0 = arith.constant 0 : i32
    %c0_i32_1 = arith.constant 0 : i32
    return %c0_i32, %c0_i32_0 : i32, i32
  }
  func.func @transform_4(%arg0: i32) -> (i32, i32) {
    %c0_i32 = arith.constant 0 : i32
    %c0_i32_0 = arith.constant 0 : i32
    %c0_i32_1 = arith.constant 0 : i32
    return %c0_i32, %c0_i32_0 : i32, i32
  }
  func.func @transform_5(%arg0: i32) -> (i32, i32, i32) {
    %c0_i32 = arith.constant 0 : i32
    %c0_i32_0 = arith.constant 0 : i32
    %c0_i32_1 = arith.constant 0 : i32
    %c0_i32_2 = arith.constant 0 : i32
    return %c0_i32, %c0_i32_0, %c0_i32_1 : i32, i32, i32
  }
  func.func @transform_6(%arg0: i32) -> (i32, i32, i32) {
    %c0_i32 = arith.constant 0 : i32
    %c0_i32_0 = arith.constant 0 : i32
    %c0_i32_1 = arith.constant 0 : i32
    %c0_i32_2 = arith.constant 0 : i32
    return %c0_i32, %c0_i32_0, %c0_i32_1 : i32, i32, i32
  }
  func.func @transform_7(%arg0: i32) -> (i32, i32) {
    %c0_i32 = arith.constant 0 : i32
    %c0_i32_0 = arith.constant 0 : i32
    %c0_i32_1 = arith.constant 0 : i32
    return %c0_i32, %c0_i32_0 : i32, i32
  }
  func.func @transform_8(%arg0: i32) -> (i32, i32) {
    %c0_i32 = arith.constant 0 : i32
    %c0_i32_0 = arith.constant 0 : i32
    %c0_i32_1 = arith.constant 0 : i32
    return %c0_i32, %c0_i32_0 : i32, i32
  }
  func.func @transform_9(%arg0: i32) -> (i32, i32) {
    %c0_i32 = arith.constant 0 : i32
    %c0_i32_0 = arith.constant 0 : i32
    %c0_i32_1 = arith.constant 0 : i32
    return %c0_i32, %c0_i32_0 : i32, i32
  }
  func.func @transform_10(%arg0: i32) -> (i32, i32, i32) {
    %c0_i32 = arith.constant 0 : i32
    %c0_i32_0 = arith.constant 0 : i32
    %c0_i32_1 = arith.constant 0 : i32
    return %arg0, %c0_i32, %c0_i32_0 : i32, i32, i32
  }
}

</mosaic_0001>

<llo_original>
// kernel: _lambda_.1
$region0: #{_lambda_.1}
  #allocation0 [shape = 'u32[]', space=smem, size = 0x4, offset = 0x4, fixed_abs, tag = 'smem constant byte address 0x4 - core index']
  #allocation1 [shape = 'u32[144,128]{1,0:T(1,128)}', space=vmem, size = 0x12000, scoped, tag = 'internal scratch']
  %s0 = inlined_call_operand.hbm [shape: f32[2,8,32], index: 0, kind: input, shape index: {}]
  %s1 = inlined_call_operand.hbm [shape: f32[2,1,8], index: 1, kind: input, shape index: {}]
  %s2 = inlined_call_operand.hbm [shape: f32[8,8], index: 2, kind: input, shape index: {}]
  %s3 = inlined_call_operand.hbm [shape: f32[8,8], index: 3, kind: input, shape index: {}]
  %s4 = inlined_call_operand.vmem [shape: f32[1,32], index: 4, kind: input, shape index: {}, may-alias: {4,7}]
  %s5 = inlined_call_operand.hbm [shape: bf16[20,32,8], index: 5, kind: input, shape index: {}]
  %s6 = inlined_call_operand.vmem [shape: bf16[4,8,32], index: 6, kind: input, shape index: {}]
  %s7 = inlined_call_operand.vmem [shape: f32[1,32], index: 7, kind: input, shape index: {}, may-alias: {4,7}]
  %s8 = inlined_call_operand.hbm [shape: bf16[32,128], index: 8, kind: input, shape index: {}]
  %s9 = inlined_call_operand.hbm [shape: bf16[64,32], index: 9, kind: input, shape index: {}]
  %s10 = inlined_call_operand.hbm [shape: f32[2,8,32], index: 10, kind: output, shape index: {}]
  %s11 = sld [smem:[#allocation0]]
  $region101: #{_lambda_.1} parent=0
    _
  %s13 = ssub.s32 1, %s11
  %s14 = scalar_select 0, %s13, %s11
  $region1: #{_lambda_.1} parent=0
    #allocation2 [shape = 'u8[8192]{0}', space=vmem, size = 0x2000, scoped, tag = 'input window, operand 0']
    #allocation3 [shape = 's32[2]{0}', space=sflag, size = 0x8, scoped, tag = 'scoped memory for _lambda_.1']
    #allocation4 [shape = 's32[2]{0}', space=sflag, size = 0x8, scoped, tag = 'scoped memory for _lambda_.1']
    #allocation5 [shape = 'u8[1024]{0}', space=vmem, size = 0x400, scoped, tag = 'input window, operand 1']
    #allocation6 [shape = 's32[2]{0}', space=sflag, size = 0x8, scoped, tag = 'scoped memory for _lambda_.1']
    #allocation7 [shape = 'u8[4096]{0}', space=vmem, size = 0x1000, scoped, tag = 'input window, operand 2, single buffered']
    #allocation8 [shape = 'u8[4096]{0}', space=vmem, size = 0x1000, scoped, tag = 'input window, operand 3, single buffered']
    #allocation9 [shape = 's32[1]{0}', space=sflag, size = 0x4, scoped, tag = 'scoped memory for _lambda_.1']
    #allocation10 [shape = 'u8[163840]{0}', space=vmem, size = 0x28000, scoped, tag = 'input window, operand 5, single buffered']
    #allocation11 [shape = 'u8[8192]{0}', space=vmem, size = 0x2000, scoped, tag = 'input window, operand 8, single buffered']
    #allocation12 [shape = 's32[1]{0}', space=sflag, size = 0x4, scoped, tag = 'scoped memory for _lambda_.1']
    #allocation13 [shape = 'u8[16384]{0}', space=vmem, size = 0x4000, scoped, tag = 'input window, operand 9, single buffered']
    #allocation14 [shape = 'u8[8192]{0}', space=vmem, size = 0x2000, scoped, tag = 'output window, operand 0']
    %15 = vsyncpa [#allocation3], 0
    %s16 = scalar_lea.sflag [#allocation3], 1
    %17 = vsyncpa %s16, 0
    %18 = vsyncpa [#allocation6], 0
    %s19 = scalar_lea.sflag [#allocation6], 1
    %20 = vsyncpa %s19, 0
    %21 = vsyncpa [#allocation9], 0
    %22 = vsyncpa [#allocation12], 0
    %23 = vsyncpa [#allocation4], 0
    %s24 = scalar_lea.sflag [#allocation4], 1
    %25 = vsyncpa %s24, 0
    loop: start=0, step=1, limit=4
    $region2: #{_lambda_.1} parent=1 // loop_pre_header
      _
    $region3: #{_lambda_.1} parent=1 // loop_header
      %s27 = sphi 0, %s31
      %p28 = scmp.ge.s32.totalorder %s27, 4
      %s37 = sphi 0, %s39
      %s40 = sphi 0, %s37
      %s41 = sphi 0, %s40
      %s57 = sphi 0, %s41
      %s63 = sphi 0, %s65
      %s66 = sphi 0, %s63
      %s67 = sphi 0, %s66
      %s83 = sphi 0, %s67
      %s87 = sphi 0, %s87
      %s89 = sphi 0, %s87
      %s90 = sphi 0, %s89
      %s104 = sphi 0, %s90
      %s108 = sphi 0, %s108
      %s110 = sphi 0, %s108
      %s111 = sphi 0, %s110
      %s125 = sphi 0, %s111
      %s129 = sphi 0, %s129
      %s131 = sphi 0, %s129
      %s132 = sphi 0, %s131
      %s146 = sphi 0, %s132
      %s150 = sphi 0, %s150
      %s152 = sphi 0, %s150
      %s153 = sphi 0, %s152
      %s167 = sphi 0, %s153
      %s171 = sphi 0, %s171
      %s173 = sphi 0, %s171
      %s174 = sphi 0, %s173
      %s188 = sphi 0, %s174
      %s192 = sphi 0, %s192
      %s194 = sphi 0, %s192
      %s195 = sphi 0, %s194
      %s209 = sphi 0, %s195
      %s213 = sphi 0, %s213
      %s215 = sphi 0, %s213
      %s216 = sphi 0, %s215
      %s230 = sphi 0, %s216
      %s234 = sphi 0, %s234
      %s236 = sphi 0, %s234
      %s237 = sphi 0, %s236
      %s251 = sphi 0, %s237
      %s257 = sphi 0, %s259
      %s260 = sphi 0, %s257
      %s261 = sphi 0, %s260
      %s277 = sphi 0, %s261
    $region4: #{_lambda_.1} parent=1 // loop_header_branch
      %30 = sbr.rel (%p28) target = $region8
    $region5: #{_lambda_.1} parent=1 // loop_body
      %s32 = ssub.s32 %s27, 1
      %s33 = ssub.s32 %s27, 2
      %s34 = sadd.s32 %s27, 1
      %s35 = ssub.s32 %s27, %s34
      %p36 = scmp.eq.s32.totalorder %s35, 0
      %s38 = sadd.s32 %s37, 1
      %s39 = scalar_select %p36, %s37, %s38
      %p42 = pneg %p36
      %p43 = scmp.eq.s32.totalorder %s27, 1
      %p44 = por %p42, %p43
      %p45 = scmp.ne.s32.totalorder %s37, %s40
      %p46 = scmp.eq.s32.totalorder %s27, 0
      %p47 = por %p45, %p46
      %p48 = scmp.ne.s32.totalorder %s37, %s40
      %p49 = scmp.eq.s32.totalorder %s32, 1
      %p50 = por %p48, %p49
      %p51 = scmp.ne.s32.totalorder %s40, %s41
      %p52 = scmp.eq.s32.totalorder %s32, 0
      %p53 = por %p51, %p52
      %p54 = scmp.ne.s32.totalorder %s40, %s41
      %p55 = scmp.eq.s32.totalorder %s33, 1
      %p56 = por %p54, %p55
      %p58 = scmp.ne.s32.totalorder %s41, %s57
      %p59 = scmp.eq.s32.totalorder %s33, 0
      %p60 = por %p58, %p59
      %s61 = ssub.s32 %s27, %s34
      %p62 = scmp.eq.s32.totalorder %s61, 0
      %s64 = sadd.s32 %s63, 1
      %s65 = scalar_select %p62, %s63, %s64
      %p68 = pneg %p62
      %p69 = scmp.eq.s32.totalorder %s27, 1
      %p70 = por %p68, %p69
      %p71 = scmp.ne.s32.totalorder %s63, %s66
      %p72 = scmp.eq.s32.totalorder %s27, 0
      %p73 = por %p71, %p72
      %p74 = scmp.ne.s32.totalorder %s63, %s66
      %p75 = scmp.eq.s32.totalorder %s32, 1
      %p76 = por %p74, %p75
      %p77 = scmp.ne.s32.totalorder %s66, %s67
      %p78 = scmp.eq.s32.totalorder %s32, 0
      %p79 = por %p77, %p78
      %p80 = scmp.ne.s32.totalorder %s66, %s67
      %p81 = scmp.eq.s32.totalorder %s33, 1
      %p82 = por %p80, %p81
      %p84 = scmp.ne.s32.totalorder %s67, %s83
      %p85 = scmp.eq.s32.totalorder %s33, 0
      %p86 = por %p84, %p85
      %s88 = sadd.s32 %s87, 1
      %p91 = scmp.eq.s32.totalorder %s27, 1
      %p92 = scmp.ne.s32.totalorder %s87, %s89
      %p93 = scmp.eq.s32.totalorder %s27, 0
      %p94 = por %p92, %p93
      %p95 = scmp.ne.s32.totalorder %s87, %s89
      %p96 = scmp.eq.s32.totalorder %s32, 1
      %p97 = por %p95, %p96
      %p98 = scmp.ne.s32.totalorder %s89, %s90
      %p99 = scmp.eq.s32.totalorder %s32, 0
      %p100 = por %p98, %p99
      %p101 = scmp.ne.s32.totalorder %s89, %s90
      %p102 = scmp.eq.s32.totalorder %s33, 1
      %p103 = por %p101, %p102
      %p105 = scmp.ne.s32.totalorder %s90, %s104
      %p106 = scmp.eq.s32.totalorder %s33, 0
      %p107 = por %p105, %p106
      %s109 = sadd.s32 %s108, 1
      %p112 = scmp.eq.s32.totalorder %s27, 1
      %p113 = scmp.ne.s32.totalorder %s108, %s110
      %p114 = scmp.eq.s32.totalorder %s27, 0
      %p115 = por %p113, %p114
      %p116 = scmp.ne.s32.totalorder %s108, %s110
      %p117 = scmp.eq.s32.totalorder %s32, 1
      %p118 = por %p116, %p117
      %p119 = scmp.ne.s32.totalorder %s110, %s111
      %p120 = scmp.eq.s32.totalorder %s32, 0
      %p121 = por %p119, %p120
      %p122 = scmp.ne.s32.totalorder %s110, %s111
      %p123 = scmp.eq.s32.totalorder %s33, 1
      %p124 = por %p122, %p123
      %p126 = scmp.ne.s32.totalorder %s111, %s125
      %p127 = scmp.eq.s32.totalorder %s33, 0
      %p128 = por %p126, %p127
      %s130 = sadd.s32 %s129, 1
      %p133 = scmp.eq.s32.totalorder %s27, 1
      %p134 = scmp.ne.s32.totalorder %s129, %s131
      %p135 = scmp.eq.s32.totalorder %s27, 0
      %p136 = por %p134, %p135
      %p137 = scmp.ne.s32.totalorder %s129, %s131
      %p138 = scmp.eq.s32.totalorder %s32, 1
      %p139 = por %p137, %p138
      %p140 = scmp.ne.s32.totalorder %s131, %s132
      %p141 = scmp.eq.s32.totalorder %s32, 0
      %p142 = por %p140, %p141
      %p143 = scmp.ne.s32.totalorder %s131, %s132
      %p144 = scmp.eq.s32.totalorder %s33, 1
      %p145 = por %p143, %p144
      %p147 = scmp.ne.s32.totalorder %s132, %s146
      %p148 = scmp.eq.s32.totalorder %s33, 0
      %p149 = por %p147, %p148
      %s151 = sadd.s32 %s150, 1
      %p154 = scmp.eq.s32.totalorder %s27, 1
      %p155 = scmp.ne.s32.totalorder %s150, %s152
      %p156 = scmp.eq.s32.totalorder %s27, 0
      %p157 = por %p155, %p156
      %p158 = scmp.ne.s32.totalorder %s150, %s152
      %p159 = scmp.eq.s32.totalorder %s32, 1
      %p160 = por %p158, %p159
      %p161 = scmp.ne.s32.totalorder %s152, %s153
      %p162 = scmp.eq.s32.totalorder %s32, 0
      %p163 = por %p161, %p162
      %p164 = scmp.ne.s32.totalorder %s152, %s153
      %p165 = scmp.eq.s32.totalorder %s33, 1
      %p166 = por %p164, %p165
      %p168 = scmp.ne.s32.totalorder %s153, %s167
      %p169 = scmp.eq.s32.totalorder %s33, 0
      %p170 = por %p168, %p169
      %s172 = sadd.s32 %s171, 1
      %p175 = scmp.eq.s32.totalorder %s27, 1
      %p176 = scmp.ne.s32.totalorder %s171, %s173
      %p177 = scmp.eq.s32.totalorder %s27, 0
      %p178 = por %p176, %p177
      %p179 = scmp.ne.s32.totalorder %s171, %s173
      %p180 = scmp.eq.s32.totalorder %s32, 1
      %p181 = por %p179, %p180
      %p182 = scmp.ne.s32.totalorder %s173, %s174
      %p183 = scmp.eq.s32.totalorder %s32, 0
      %p184 = por %p182, %p183
      %p185 = scmp.ne.s32.totalorder %s173, %s174
      %p186 = scmp.eq.s32.totalorder %s33, 1
      %p187 = por %p185, %p186
      %p189 = scmp.ne.s32.totalorder %s174, %s188
      %p190 = scmp.eq.s32.totalorder %s33, 0
      %p191 = por %p189, %p190
      %s193 = sadd.s32 %s192, 1
      %p196 = scmp.eq.s32.totalorder %s27, 1
      %p197 = scmp.ne.s32.totalorder %s192, %s194
      %p198 = scmp.eq.s32.totalorder %s27, 0
      %p199 = por %p197, %p198
      %p200 = scmp.ne.s32.totalorder %s192, %s194
      %p201 = scmp.eq.s32.totalorder %s32, 1
      %p202 = por %p200, %p201
      %p203 = scmp.ne.s32.totalorder %s194, %s195
      %p204 = scmp.eq.s32.totalorder %s32, 0
      %p205 = por %p203, %p204
      %p206 = scmp.ne.s32.totalorder %s194, %s195
      %p207 = scmp.eq.s32.totalorder %s33, 1
      %p208 = por %p206, %p207
      %p210 = scmp.ne.s32.totalorder %s195, %s209
      %p211 = scmp.eq.s32.totalorder %s33, 0
      %p212 = por %p210, %p211
      %s214 = sadd.s32 %s213, 1
      %p217 = scmp.eq.s32.totalorder %s27, 1
      %p218 = scmp.ne.s32.totalorder %s213, %s215
      %p219 = scmp.eq.s32.totalorder %s27, 0
      %p220 = por %p218, %p219
      %p221 = scmp.ne.s32.totalorder %s213, %s215
      %p222 = scmp.eq.s32.totalorder %s32, 1
      %p223 = por %p221, %p222
      %p224 = scmp.ne.s32.totalorder %s215, %s216
      %p225 = scmp.eq.s32.totalorder %s32, 0
      %p226 = por %p224, %p225
      %p227 = scmp.ne.s32.totalorder %s215, %s216
      %p228 = scmp.eq.s32.totalorder %s33, 1
      %p229 = por %p227, %p228
      %p231 = scmp.ne.s32.totalorder %s216, %s230
      %p232 = scmp.eq.s32.totalorder %s33, 0
      %p233 = por %p231, %p232
      %s235 = sadd.s32 %s234, 1
      %p238 = scmp.eq.s32.totalorder %s27, 1
      %p239 = scmp.ne.s32.totalorder %s234, %s236
      %p240 = scmp.eq.s32.totalorder %s27, 0
      %p241 = por %p239, %p240
      %p242 = scmp.ne.s32.totalorder %s234, %s236
      %p243 = scmp.eq.s32.totalorder %s32, 1
      %p244 = por %p242, %p243
      %p245 = scmp.ne.s32.totalorder %s236, %s237
      %p246 = scmp.eq.s32.totalorder %s32, 0
      %p247 = por %p245, %p246
      %p248 = scmp.ne.s32.totalorder %s236, %s237
      %p249 = scmp.eq.s32.totalorder %s33, 1
      %p250 = por %p248, %p249
      %p252 = scmp.ne.s32.totalorder %s237, %s251
      %p253 = scmp.eq.s32.totalorder %s33, 0
      %p254 = por %p252, %p253
      %s255 = ssub.s32 %s27, %s34
      %p256 = scmp.eq.s32.totalorder %s255, 0
      %s258 = sadd.s32 %s257, 1
      %s259 = scalar_select %p256, %s257, %s258
      %p262 = pneg %p256
      %p263 = scmp.eq.s32.totalorder %s27, 1
      %p264 = por %p262, %p263
      %p265 = scmp.ne.s32.totalorder %s257, %s260
      %p266 = scmp.eq.s32.totalorder %s27, 0
      %p267 = por %p265, %p266
      %p268 = scmp.ne.s32.totalorder %s257, %s260
      %p269 = scmp.eq.s32.totalorder %s32, 1
      %p270 = por %p268, %p269
      %p271 = scmp.ne.s32.totalorder %s260, %s261
      %p272 = scmp.eq.s32.totalorder %s32, 0
      %p273 = por %p271, %p272
      %p274 = scmp.ne.s32.totalorder %s260, %s261
      %p275 = scmp.eq.s32.totalorder %s33, 1
      %p276 = por %p274, %p275
      %p278 = scmp.ne.s32.totalorder %s261, %s277
      %p279 = scmp.eq.s32.totalorder %s33, 0
      %p280 = por %p278, %p279
      %p281 = scmp.le.s32.totalorder 1, %s27
      %p282 = scmp.lt.s32.totalorder %s27, 3
      %p283 = pnand %p281, %p282
      %p284 = pneg %p283
      // Predicated region
      $region9: #{_lambda_.1} parent=5 // pred_check
        _
      $region10: #{_lambda_.1} parent=5 // pred_check_branch
        %286 = sbr.rel (%p283) target = $region12
      $region11: #{_lambda_.1} parent=5 // pred_region
        %s287 = ssub.s32 %s27, 1
        // Predicated region
        $region13: #{_lambda_.1} parent=11 // pred_check
          %p288 = pneg %p100
        $region14: #{_lambda_.1} parent=11 // pred_check_branch
          %290 = sbr.rel (%p288) target = $region16
        $region15: #{_lambda_.1} parent=11 // pred_region
          %s292 = ssub.s32 128, 128
          %293 = vsyncadd [#allocation6], %s292
          %s295 = sshll.u32 [#allocation7], 4
          %s296 = int_to_ptr.vmem [resolvable:$true] %s295
          %298 = dma.hbm_to_vmem [thread:$0]  %s2, 128, %s296, [#allocation6]
        $region16: #{_lambda_.1} parent=11 // pred_fallthru
          _
        // Predicated region
        $region17: #{_lambda_.1} parent=11 // pred_check
          %p299 = pneg %p121
        $region18: #{_lambda_.1} parent=11 // pred_check_branch
          %301 = sbr.rel (%p299) target = $region20
        $region19: #{_lambda_.1} parent=11 // pred_region
          %s303 = ssub.s32 128, 128
          %304 = vsyncadd [#allocation9], %s303
          %s306 = sshll.u32 [#allocation8], 4
          %s307 = int_to_ptr.vmem [resolvable:$true] %s306
          %309 = dma.hbm_to_vmem [thread:$0]  %s3, 128, %s307, [#allocation9]
        $region20: #{_lambda_.1} parent=11 // pred_fallthru
          _
        // Predicated region
        $region21: #{_lambda_.1} parent=11 // pred_check
          %p310 = pneg %p142
        $region22: #{_lambda_.1} parent=11 // pred_check_branch
          %312 = sbr.rel (%p310) target = $region24
        $region23: #{_lambda_.1} parent=11 // pred_region
          _
        $region24: #{_lambda_.1} parent=11 // pred_fallthru
          _
        // Predicated region
        $region25: #{_lambda_.1} parent=11 // pred_check
          %p313 = pneg %p163
        $region26: #{_lambda_.1} parent=11 // pred_check_branch
          %315 = sbr.rel (%p313) target = $region28
        $region27: #{_lambda_.1} parent=11 // pred_region
          %s317 = ssub.s32 5120, 5120
          %318 = vsyncadd [#allocation9], %s317
          %s319 = sshll.u32 [#allocation10], 4
          %s320 = int_to_ptr.vmem [resolvable:$true] %s319
          %325 = dma.hbm_to_vmem [thread:$0]  %s5, 5120, %s320, [#allocation9], 64, 64, 4
        $region28: #{_lambda_.1} parent=11 // pred_fallthru
          _
        // Predicated region
        $region29: #{_lambda_.1} parent=11 // pred_check
          %p326 = pneg %p184
        $region30: #{_lambda_.1} parent=11 // pred_check_branch
          %328 = sbr.rel (%p326) target = $region32
        $region31: #{_lambda_.1} parent=11 // pred_region
          _
        $region32: #{_lambda_.1} parent=11 // pred_fallthru
          _
        // Predicated region
        $region33: #{_lambda_.1} parent=11 // pred_check
          %p329 = pneg %p205
        $region34: #{_lambda_.1} parent=11 // pred_check_branch
          %331 = sbr.rel (%p329) target = $region36
        $region35: #{_lambda_.1} parent=11 // pred_region
          _
        $region36: #{_lambda_.1} parent=11 // pred_fallthru
          _
        // Predicated region
        $region37: #{_lambda_.1} parent=11 // pred_check
          %p332 = pneg %p226
        $region38: #{_lambda_.1} parent=11 // pred_check_branch
          %334 = sbr.rel (%p332) target = $region40
        $region39: #{_lambda_.1} parent=11 // pred_region
          %s336 = ssub.s32 256, 256
          %337 = vsyncadd [#allocation12], %s336
          %s338 = sshll.u32 [#allocation11], 4
          %s339 = int_to_ptr.vmem [resolvable:$true] %s338
          %344 = dma.hbm_to_vmem [thread:$0]  %s8, 256, %s339, [#allocation12], 64, 64, 4
        $region40: #{_lambda_.1} parent=11 // pred_fallthru
          _
        // Predicated region
        $region41: #{_lambda_.1} parent=11 // pred_check
          %p345 = pneg %p247
        $region42: #{_lambda_.1} parent=11 // pred_check_branch
          %347 = sbr.rel (%p345) target = $region44
        $region43: #{_lambda_.1} parent=11 // pred_region
          %s349 = ssub.s32 512, 512
          %350 = vsyncadd [#allocation12], %s349
          %s351 = sshll.u32 [#allocation13], 4
          %s352 = int_to_ptr.vmem [resolvable:$true] %s351
          %357 = dma.hbm_to_vmem [thread:$0]  %s9, 512, %s352, [#allocation12], 64, 64, 4
        $region44: #{_lambda_.1} parent=11 // pred_fallthru
          _
      $region12: #{_lambda_.1} parent=5 // pred_fallthru
        _
      %p358 = scmp.lt.s32.totalorder %s27, 2
      // Predicated region
      $region45: #{_lambda_.1} parent=5 // pred_check
        %p359 = pneg %p358
      $region46: #{_lambda_.1} parent=5 // pred_check_branch
        %361 = sbr.rel (%p359) target = $region48
      $region47: #{_lambda_.1} parent=5 // pred_region
        // Predicated region
        $region49: #{_lambda_.1} parent=47 // pred_check
          %p362 = pneg %p47
        $region50: #{_lambda_.1} parent=47 // pred_check_branch
          %364 = sbr.rel (%p362) target = $region52
        $region51: #{_lambda_.1} parent=47 // pred_region
          %s365 = sand.u32 %s37, 1
          %s366 = scalar_lea.sflag [#allocation3], %s365
          %s367 = sand.u32 %s37, 1
          %s368 = smul.addr %s367, 8
          %s369 = scalar_lea.vmem [#allocation2], %s368
          %s371 = ssub.s32 128, 128
          %372 = vsyncadd %s366, %s371
          %s373 = smul.addr %s27, 128
          %s374 = scalar_lea.hbm %s0, %s373
          %s376 = sshll.u32 %s369, 4
          %s377 = int_to_ptr.vmem [resolvable:$true] %s376
          %379 = dma.hbm_to_vmem [thread:$0]  %s374, 128, %s377, %s366
        $region52: #{_lambda_.1} parent=47 // pred_fallthru
          _
        // Predicated region
        $region53: #{_lambda_.1} parent=47 // pred_check
          %p380 = pneg %p73
        $region54: #{_lambda_.1} parent=47 // pred_check_branch
          %382 = sbr.rel (%p380) target = $region56
        $region55: #{_lambda_.1} parent=47 // pred_region
          %s383 = sand.u32 %s27, 1
          %s384 = scalar_lea.sflag [#allocation6], %s383
          %s385 = sand.u32 %s63, 1
          %s386 = scalar_lea.vmem [#allocation5], %s385
          %s388 = ssub.s32 16, 16
          %389 = vsyncadd %s384, %s388
          %s390 = smul.addr %s27, 16
          %s391 = scalar_lea.hbm %s1, %s390
          %s393 = sshll.u32 %s386, 4
          %s394 = int_to_ptr.vmem [resolvable:$true] %s393
          %396 = dma.hbm_to_vmem [thread:$0]  %s391, 16, %s394, %s384
        $region56: #{_lambda_.1} parent=47 // pred_fallthru
          _
      $region48: #{_lambda_.1} parent=5 // pred_fallthru
        _
      %p397 = scmp.le.s32.totalorder 1, %s27
      %p398 = scmp.lt.s32.totalorder %s27, 3
      %p399 = pnand %p397, %p398
      %p400 = pneg %p399
      // Predicated region
      $region57: #{_lambda_.1} parent=5 // pred_check
        _
      $region58: #{_lambda_.1} parent=5 // pred_check_branch
        %402 = sbr.rel (%p399) target = $region60
      $region59: #{_lambda_.1} parent=5 // pred_region
        %s403 = ssub.s32 %s27, 1
        %s404 = sand.u32 %s40, 1
        %s405 = scalar_lea.sflag [#allocation3], %s404
        %s406 = sand.u32 %s40, 1
        %s407 = smul.addr %s406, 8
        %s408 = scalar_lea.vmem [#allocation2], %s407
        // Predicated region
        $region61: #{_lambda_.1} parent=59 // pred_check
          %p409 = pneg %p53
        $region62: #{_lambda_.1} parent=59 // pred_check_branch
          %411 = sbr.rel (%p409) target = $region64
        $region63: #{_lambda_.1} parent=59 // pred_region
          %412 = dma.done %s405, 128
        $region64: #{_lambda_.1} parent=59 // pred_fallthru
          _
        %s413 = sand.u32 %s32, 1
        %s414 = scalar_lea.sflag [#allocation6], %s413
        %s415 = sand.u32 %s66, 1
        %s416 = scalar_lea.vmem [#allocation5], %s415
        // Predicated region
        $region65: #{_lambda_.1} parent=59 // pred_check
          %p417 = pneg %p79
        $region66: #{_lambda_.1} parent=59 // pred_check_branch
          %419 = sbr.rel (%p417) target = $region68
        $region67: #{_lambda_.1} parent=59 // pred_region
          %420 = dma.done %s414, 16
        $region68: #{_lambda_.1} parent=59 // pred_fallthru
          _
        // Predicated region
        $region69: #{_lambda_.1} parent=59 // pred_check
          %p421 = pneg %p100
        $region70: #{_lambda_.1} parent=59 // pred_check_branch
          %423 = sbr.rel (%p421) target = $region72
        $region71: #{_lambda_.1} parent=59 // pred_region
          %424 = dma.done [#allocation6], 128
        $region72: #{_lambda_.1} parent=59 // pred_fallthru
          _
        // Predicated region
        $region73: #{_lambda_.1} parent=59 // pred_check
          %p425 = pneg %p121
        $region74: #{_lambda_.1} parent=59 // pred_check_branch
          %427 = sbr.rel (%p425) target = $region76
        $region75: #{_lambda_.1} parent=59 // pred_region
          %428 = dma.done [#allocation9], 128
        $region76: #{_lambda_.1} parent=59 // pred_fallthru
          _
        // Predicated region
        $region77: #{_lambda_.1} parent=59 // pred_check
          %p429 = pneg %p163
        $region78: #{_lambda_.1} parent=59 // pred_check_branch
          %431 = sbr.rel (%p429) target = $region80
        $region79: #{_lambda_.1} parent=59 // pred_region
          %432 = dma.done [#allocation9], 5120
        $region80: #{_lambda_.1} parent=59 // pred_fallthru
          _
        // Predicated region
        $region81: #{_lambda_.1} parent=59 // pred_check
          %p433 = pneg %p226
        $region82: #{_lambda_.1} parent=59 // pred_check_branch
          %435 = sbr.rel (%p433) target = $region84
        $region83: #{_lambda_.1} parent=59 // pred_region
          %436 = dma.done [#allocation12], 256
        $region84: #{_lambda_.1} parent=59 // pred_fallthru
          _
        // Predicated region
        $region85: #{_lambda_.1} parent=59 // pred_check
          %p437 = pneg %p247
        $region86: #{_lambda_.1} parent=59 // pred_check_branch
          %439 = sbr.rel (%p437) target = $region88
        $region87: #{_lambda_.1} parent=59 // pred_region
          %440 = dma.done [#allocation12], 512
        $region88: #{_lambda_.1} parent=59 // pred_fallthru
          _
        %s441 = sand.u32 %s40, 1
        %s442 = scalar_lea.sflag [#allocation3], %s441
        %s443 = sand.u32 %s40, 1
        %s444 = smul.addr %s443, 8
        %s445 = scalar_lea.vmem [#allocation2], %s444
        %p446 = pneg %p53
        %p447 = pneg %p50
        %s448 = sand.u32 %s32, 1
        %s449 = scalar_lea.sflag [#allocation6], %s448
        %s450 = sand.u32 %s66, 1
        %s451 = scalar_lea.vmem [#allocation5], %s450
        %p452 = pneg %p79
        %p453 = pneg %p76
        %p454 = pneg %p100
        %p455 = pneg %p97
        %p456 = pneg %p121
        %p457 = pneg %p118
        %p458 = pneg %p142
        %p459 = pneg %p139
        %p460 = pneg %p163
        %p461 = pneg %p160
        %p462 = pneg %p184
        %p463 = pneg %p181
        %p464 = pneg %p205
        %p465 = pneg %p202
        %p466 = pneg %p226
        %p467 = pneg %p223
        %p468 = pneg %p247
        %p469 = pneg %p244
        %p470 = pneg %p273
        %p471 = pneg %p270
        %s472 = sand.u32 %s260, 1
        %s473 = scalar_lea.sflag [#allocation4], %s472
        %s474 = sand.u32 %s260, 1
        %s475 = smul.addr %s474, 8
        %s476 = scalar_lea.vmem [#allocation14], %s475
        %v478 = vld [vmem:[%s408] sm:$0xff]
        %v479 = vlaneseq
        %v480 = vshrl.u32 %v479, 7
        %v481 = vlaneseq
        %v482 = vand.u32 %v481, 127
        %vm483 = vcmp.ge.s32.totalorder %v480, %v482
        %v484 = vld [vmem:[%s416] sm:$0x1]
        %vm485 = vcmp.gt.f32.partialorder %v484, 0.5
        %v486 = vsel %vm485, 1, 0
        %v487 = vlaneseq
        %v488 = vshrl.u32 %v487, 7
        %v489 = vsub.s32 0, %v488
        %v490 = vrot.slane %v486, %v489
        %vm491 = vcmp.eq.s32.totalorder %v490, 1
        %vm492 = vmand %vm483, %vm491
        %v493 = vsel %vm492, 0.0, -1e+30
        %v494 = vmul.f32 %v478, %v478
        %vm495 = vcmask 261120
        %v496 = vsel %vm495, %v494, 0.0
        %497 = vadd.xlane.f32.xlu0 %v496
        %v498 = vpop.xlane.xlu0 %497
        %v499 = vrcp.pop 32.0
        %v500 = vmul.f32 %v498, %v499
        %v501 = vadd.f32 %v500, 1e-06
        %v502 = vrsqrt.pop %v501
        %v503 = vmul.f32 %v478, %v502
        %v504 = vld [vmem:[%s4] sm:$0x1]
        %v506 = vlaneseq
        %v507 = vshrl.u32 %v506, 7
        %v508 = vsub.s32 0, %v507
        %v509 = vrot.slane %v504, %v508
        %v511 = vmul.f32 %v503, %v509
        %v512 = vpack.c.bf16 %v511, %v511
        %v513 = vld [vmem:[#allocation10] sm:$0xf]
        %v514 = vld [vmem:[#allocation10 + $0x4] sm:$0xf]
        %v515 = vld [vmem:[#allocation10 + $0x8] sm:$0xf]
        %v516 = vld [vmem:[#allocation10 + $0xc] sm:$0xf]
        %v517 = vld [vmem:[#allocation10 + $0x10] sm:$0xf]
        %v518 = vld [vmem:[#allocation10 + $0x14] sm:$0xf]
        %v519 = vld [vmem:[#allocation10 + $0x18] sm:$0xf]
        %v520 = vld [vmem:[#allocation10 + $0x1c] sm:$0xf]
        %v521 = vld [vmem:[#allocation10 + $0x20] sm:$0xf]
        %v522 = vld [vmem:[#allocation10 + $0x24] sm:$0xf]
        %v523 = vld [vmem:[#allocation10 + $0x28] sm:$0xf]
        %v524 = vld [vmem:[#allocation10 + $0x2c] sm:$0xf]
        %v525 = vld [vmem:[#allocation10 + $0x30] sm:$0xf]
        %v526 = vld [vmem:[#allocation10 + $0x34] sm:$0xf]
        %v527 = vld [vmem:[#allocation10 + $0x38] sm:$0xf]
        %v528 = vld [vmem:[#allocation10 + $0x3c] sm:$0xf]
        %v529 = vld [vmem:[#allocation10 + $0x40] sm:$0xf]
        %v530 = vld [vmem:[#allocation10 + $0x44] sm:$0xf]
        %v531 = vld [vmem:[#allocation10 + $0x48] sm:$0xf]
        %v532 = vld [vmem:[#allocation10 + $0x4c] sm:$0xf]
        %v533 = vld [vmem:[#allocation10 + $0x50] sm:$0xf]
        %v534 = vld [vmem:[#allocation10 + $0x54] sm:$0xf]
        %v535 = vld [vmem:[#allocation10 + $0x58] sm:$0xf]
        %v536 = vld [vmem:[#allocation10 + $0x5c] sm:$0xf]
        %v537 = vld [vmem:[#allocation10 + $0x60] sm:$0xf]
        %v538 = vld [vmem:[#allocation10 + $0x64] sm:$0xf]
        %v539 = vld [vmem:[#allocation10 + $0x68] sm:$0xf]
        %v540 = vld [vmem:[#allocation10 + $0x6c] sm:$0xf]
        %v541 = vld [vmem:[#allocation10 + $0x70] sm:$0xf]
        %v542 = vld [vmem:[#allocation10 + $0x74] sm:$0xf]
        %v543 = vld [vmem:[#allocation10 + $0x78] sm:$0xf]
        %v544 = vld [vmem:[#allocation10 + $0x7c] sm:$0xf]
        %v545 = vld [vmem:[#allocation10 + $0x80] sm:$0xf]
        %v546 = vld [vmem:[#allocation10 + $0x84] sm:$0xf]
        %v547 = vld [vmem:[#allocation10 + $0x88] sm:$0xf]
        %v548 = vld [vmem:[#allocation10 + $0x8c] sm:$0xf]
        %v549 = vld [vmem:[#allocation10 + $0x90] sm:$0xf]
        %v550 = vld [vmem:[#allocation10 + $0x94] sm:$0xf]
        %v551 = vld [vmem:[#allocation10 + $0x98] sm:$0xf]
        %v552 = vld [vmem:[#allocation10 + $0x9c] sm:$0xf]
        %v553 = vld [vmem:[#allocation10 + $0xa0] sm:$0xf]
        %v554 = vld [vmem:[#allocation10 + $0xa4] sm:$0xf]
        %v555 = vld [vmem:[#allocation10 + $0xa8] sm:$0xf]
        %v556 = vld [vmem:[#allocation10 + $0xac] sm:$0xf]
        %v557 = vld [vmem:[#allocation10 + $0xb0] sm:$0xf]
        %v558 = vld [vmem:[#allocation10 + $0xb4] sm:$0xf]
        %v559 = vld [vmem:[#allocation10 + $0xb8] sm:$0xf]
        %v560 = vld [vmem:[#allocation10 + $0xbc] sm:$0xf]
        %v561 = vld [vmem:[#allocation10 + $0xc0] sm:$0xf]
        %v562 = vld [vmem:[#allocation10 + $0xc4] sm:$0xf]
        %v563 = vld [vmem:[#allocation10 + $0xc8] sm:$0xf]
        %v564 = vld [vmem:[#allocation10 + $0xcc] sm:$0xf]
        %v565 = vld [vmem:[#allocation10 + $0xd0] sm:$0xf]
        %v566 = vld [vmem:[#allocation10 + $0xd4] sm:$0xf]
        %v567 = vld [vmem:[#allocation10 + $0xd8] sm:$0xf]
        %v568 = vld [vmem:[#allocation10 + $0xdc] sm:$0xf]
        %v569 = vld [vmem:[#allocation10 + $0xe0] sm:$0xf]
        %v570 = vld [vmem:[#allocation10 + $0xe4] sm:$0xf]
        %v571 = vld [vmem:[#allocation10 + $0xe8] sm:$0xf]
        %v572 = vld [vmem:[#allocation10 + $0xec] sm:$0xf]
        %v573 = vld [vmem:[#allocation10 + $0xf0] sm:$0xf]
        %v574 = vld [vmem:[#allocation10 + $0xf4] sm:$0xf]
        %v575 = vld [vmem:[#allocation10 + $0xf8] sm:$0xf]
        %v576 = vld [vmem:[#allocation10 + $0xfc] sm:$0xf]
        %v577 = vld [vmem:[#allocation10 + $0x100] sm:$0xf]
        %v578 = vld [vmem:[#allocation10 + $0x104] sm:$0xf]
        %v579 = vld [vmem:[#allocation10 + $0x108] sm:$0xf]
        %v580 = vld [vmem:[#allocation10 + $0x10c] sm:$0xf]
        %v581 = vld [vmem:[#allocation10 + $0x110] sm:$0xf]
        %v582 = vld [vmem:[#allocation10 + $0x114] sm:$0xf]
        %v583 = vld [vmem:[#allocation10 + $0x118] sm:$0xf]
        %v584 = vld [vmem:[#allocation10 + $0x11c] sm:$0xf]
        %v585 = vld [vmem:[#allocation10 + $0x120] sm:$0xf]
        %v586 = vld [vmem:[#allocation10 + $0x124] sm:$0xf]
        %v587 = vld [vmem:[#allocation10 + $0x128] sm:$0xf]
        %v588 = vld [vmem:[#allocation10 + $0x12c] sm:$0xf]
        %v589 = vld [vmem:[#allocation10 + $0x130] sm:$0xf]
        %v590 = vld [vmem:[#allocation10 + $0x134] sm:$0xf]
        %v591 = vld [vmem:[#allocation10 + $0x138] sm:$0xf]
        %v592 = vld [vmem:[#allocation10 + $0x13c] sm:$0xf]
        %v597 = vunpack.c.l.b16 %v513
        %v598 = vunpack.c.l.b16 %v514
        %v599 = vunpack.c.l.b16 %v515
        %v600 = vunpack.c.l.b16 %v516
        %v601 = vpack.c.b16 %v598, %v597
        %v602 = vpack.c.b16 %v600, %v599
        %v606 = vsel %vm495, %v512, 0
        %608 = vmatprep.subr.bf16.mxu0 0
        %609 = vmatpush1.bf16.msra.mxu0 0
        %610 = vmatprep.subr.bf16.mxu0 0
        %611 = vmatpush1.bf16.msra.mxu0 0
        %612 = vmatprep.subr.bf16.mxu0 0
        %613 = vmatpush1.bf16.msra.mxu0 0
        %614 = vmatprep.subr.bf16.mxu0 0
        %615 = vmatpush1.bf16.msra.mxu0 0
        %616 = vmatprep.subr.bf16.mxu0 0
        %617 = vmatpush1.bf16.msra.mxu0 0
        %618 = vmatprep.subr.bf16.mxu0 0
        %619 = vmatpush1.bf16.msra.mxu0 0
        %620 = vmatprep.subr.bf16.mxu0 0
        %621 = vmatpush1.bf16.msra.mxu0 %v602
        %622 = vmatprep.subr.bf16.mxu0 0
        %623 = vmatpush1.bf16.msra.mxu0 %v601
        %624 = vmatprep.subr.bf16.mxu0 0
        %625 = vmatpush2.bf16.msra.mxu0 0
        %626 = vmatprep.subr.bf16.mxu0 0
        %627 = vmatpush2.bf16.msra.mxu0 0
        %628 = vmatprep.subr.bf16.mxu0 0
        %629 = vmatpush2.bf16.msra.mxu0 0
        %630 = vmatprep.subr.bf16.mxu0 0
        %631 = vmatpush2.bf16.msra.mxu0 0
        %632 = vmatprep.subr.bf16.mxu0 0
        %633 = vmatpush2.bf16.msra.mxu0 0
        %634 = vmatprep.subr.bf16.mxu0 0
        %635 = vmatpush2.bf16.msra.mxu0 0
        %636 = vmatprep.subr.bf16.mxu0 0
        %637 = vmatpush2.bf16.msra.mxu0 0
        %638 = vmatprep.subr.bf16.mxu0 0
        %639 = vmatpush2.bf16.msra.mxu0 0
        %640 = vmatprep.mubr.bf16.mxu0 0
        %641 = vmatmul.mubr.bf16.gmra.mxu0 %v606
        %v642 = vpop.f32.mrf.mxu0
        %v643 = vadd.f32 0.0, %v642
        %v644 = vpop.f32.mrf.mxu0
        %v645 = vpop.f32.mrf.mxu0
        %v646 = vpop.f32.mrf.mxu0
        %647 = vdwg.mxu0
        %v652 = vunpack.c.l.b16 %v517
        %v653 = vunpack.c.l.b16 %v518
        %v654 = vunpack.c.l.b16 %v519
        %v655 = vunpack.c.l.b16 %v520
        %v656 = vpack.c.b16 %v653, %v652
        %v657 = vpack.c.b16 %v655, %v654
        %660 = vmatprep.subr.bf16.mxu0 0
        %661 = vmatpush1.bf16.msra.mxu0 0
        %662 = vmatprep.subr.bf16.mxu0 0
        %663 = vmatpush1.bf16.msra.mxu0 0
        %664 = vmatprep.subr.bf16.mxu0 0
        %665 = vmatpush1.bf16.msra.mxu0 0
        %666 = vmatprep.subr.bf16.mxu0 0
        %667 = vmatpush1.bf16.msra.mxu0 0
        %668 = vmatprep.subr.bf16.mxu0 0
        %669 = vmatpush1.bf16.msra.mxu0 0
        %670 = vmatprep.subr.bf16.mxu0 0
        %671 = vmatpush1.bf16.msra.mxu0 0
        %672 = vmatprep.subr.bf16.mxu0 0
        %673 = vmatpush1.bf16.msra.mxu0 %v657
        %674 = vmatprep.subr.bf16.mxu0 0
        %675 = vmatpush1.bf16.msra.mxu0 %v656
        %676 = vmatprep.subr.bf16.mxu0 0
        %677 = vmatpush2.bf16.msra.mxu0 0
        %678 = vmatprep.subr.bf16.mxu0 0
        %679 = vmatpush2.bf16.msra.mxu0 0
        %680 = vmatprep.subr.bf16.mxu0 0
        %681 = vmatpush2.bf16.msra.mxu0 0
        %682 = vmatprep.subr.bf16.mxu0 0
        %683 = vmatpush2.bf16.msra.mxu0 0
        %684 = vmatprep.subr.bf16.mxu0 0
        %685 = vmatpush2.bf16.msra.mxu0 0
        %686 = vmatprep.subr.bf16.mxu0 0
        %687 = vmatpush2.bf16.msra.mxu0 0
        %688 = vmatprep.subr.bf16.mxu0 0
        %689 = vmatpush2.bf16.msra.mxu0 0
        %690 = vmatprep.subr.bf16.mxu0 0
        %691 = vmatpush2.bf16.msra.mxu0 0
        %692 = vmatprep.mubr.bf16.mxu0 0
        %693 = vmatmul.mubr.bf16.gmra.mxu0 %v606
        %v694 = vpop.f32.mrf.mxu0
        %v695 = vadd.f32 0.0, %v694
        %v696 = vpop.f32.mrf.mxu0
        %v697 = vpop.f32.mrf.mxu0
        %v698 = vpop.f32.mrf.mxu0
        %699 = vdwg.mxu0
        %v704 = vunpack.c.l.b16 %v521
        %v705 = vunpack.c.l.b16 %v522
        %v706 = vunpack.c.l.b16 %v523
        %v707 = vunpack.c.l.b16 %v524
        %v708 = vpack.c.b16 %v705, %v704
        %v709 = vpack.c.b16 %v707, %v706
        %712 = vmatprep.subr.bf16.mxu0 0
        %713 = vmatpush1.bf16.msra.mxu0 0
        %714 = vmatprep.subr.bf16.mxu0 0
        %715 = vmatpush1.bf16.msra.mxu0 0
        %716 = vmatprep.subr.bf16.mxu0 0
        %717 = vmatpush1.bf16.msra.mxu0 0
        %718 = vmatprep.subr.bf16.mxu0 0
        %719 = vmatpush1.bf16.msra.mxu0 0
        %720 = vmatprep.subr.bf16.mxu0 0
        %721 = vmatpush1.bf16.msra.mxu0 0
        %722 = vmatprep.subr.bf16.mxu0 0
        %723 = vmatpush1.bf16.msra.mxu0 0
        %724 = vmatprep.subr.bf16.mxu0 0
        %725 = vmatpush1.bf16.msra.mxu0 %v709
        %726 = vmatprep.subr.bf16.mxu0 0
        %727 = vmatpush1.bf16.msra.mxu0 %v708
        %728 = vmatprep.subr.bf16.mxu0 0
        %729 = vmatpush2.bf16.msra.mxu0 0
        %730 = vmatprep.subr.bf16.mxu0 0
        %731 = vmatpush2.bf16.msra.mxu0 0
        %732 = vmatprep.subr.bf16.mxu0 0
        %733 = vmatpush2.bf16.msra.mxu0 0
        %734 = vmatprep.subr.bf16.mxu0 0
        %735 = vmatpush2.bf16.msra.mxu0 0
        %736 = vmatprep.subr.bf16.mxu0 0
        %737 = vmatpush2.bf16.msra.mxu0 0
        %738 = vmatprep.subr.bf16.mxu0 0
        %739 = vmatpush2.bf16.msra.mxu0 0
        %740 = vmatprep.subr.bf16.mxu0 0
        %741 = vmatpush2.bf16.msra.mxu0 0
        %742 = vmatprep.subr.bf16.mxu0 0
        %743 = vmatpush2.bf16.msra.mxu0 0
        %744 = vmatprep.mubr.bf16.mxu0 0
        %745 = vmatmul.mubr.bf16.gmra.mxu0 %v606
        %v746 = vpop.f32.mrf.mxu0
        %v747 = vadd.f32 0.0, %v746
        %v748 = vpop.f32.mrf.mxu0
        %v749 = vpop.f32.mrf.mxu0
        %v750 = vpop.f32.mrf.mxu0
        %751 = vdwg.mxu0
        %v756 = vunpack.c.l.b16 %v525
        %v757 = vunpack.c.l.b16 %v526
        %v758 = vunpack.c.l.b16 %v527
        %v759 = vunpack.c.l.b16 %v528
        %v760 = vpack.c.b16 %v757, %v756
        %v761 = vpack.c.b16 %v759, %v758
        %764 = vmatprep.subr.bf16.mxu0 0
        %765 = vmatpush1.bf16.msra.mxu0 0
        %766 = vmatprep.subr.bf16.mxu0 0
        %767 = vmatpush1.bf16.msra.mxu0 0
        %768 = vmatprep.subr.bf16.mxu0 0
        %769 = vmatpush1.bf16.msra.mxu0 0
        %770 = vmatprep.subr.bf16.mxu0 0
        %771 = vmatpush1.bf16.msra.mxu0 0
        %772 = vmatprep.subr.bf16.mxu0 0
        %773 = vmatpush1.bf16.msra.mxu0 0
        %774 = vmatprep.subr.bf16.mxu0 0
        %775 = vmatpush1.bf16.msra.mxu0 0
        %776 = vmatprep.subr.bf16.mxu0 0
        %777 = vmatpush1.bf16.msra.mxu0 %v761
        %778 = vmatprep.subr.bf16.mxu0 0
        %779 = vmatpush1.bf16.msra.mxu0 %v760
        %780 = vmatprep.subr.bf16.mxu0 0
        %781 = vmatpush2.bf16.msra.mxu0 0
        %782 = vmatprep.subr.bf16.mxu0 0
        %783 = vmatpush2.bf16.msra.mxu0 0
        %784 = vmatprep.subr.bf16.mxu0 0
        %785 = vmatpush2.bf16.msra.mxu0 0
        %786 = vmatprep.subr.bf16.mxu0 0
        %787 = vmatpush2.bf16.msra.mxu0 0
        %788 = vmatprep.subr.bf16.mxu0 0
        %789 = vmatpush2.bf16.msra.mxu0 0
        %790 = vmatprep.subr.bf16.mxu0 0
        %791 = vmatpush2.bf16.msra.mxu0 0
        %792 = vmatprep.subr.bf16.mxu0 0
        %793 = vmatpush2.bf16.msra.mxu0 0
        %794 = vmatprep.subr.bf16.mxu0 0
        %795 = vmatpush2.bf16.msra.mxu0 0
        %796 = vmatprep.mubr.bf16.mxu0 0
        %797 = vmatmul.mubr.bf16.gmra.mxu0 %v606
        %v798 = vpop.f32.mrf.mxu0
        %v799 = vadd.f32 0.0, %v798
        %v800 = vpop.f32.mrf.mxu0
        %v801 = vpop.f32.mrf.mxu0
        %v802 = vpop.f32.mrf.mxu0
        %803 = vdwg.mxu0
        %v808 = vunpack.c.l.b16 %v529
        %v809 = vunpack.c.l.b16 %v530
        %v810 = vunpack.c.l.b16 %v531
        %v811 = vunpack.c.l.b16 %v532
        %v812 = vpack.c.b16 %v809, %v808
        %v813 = vpack.c.b16 %v811, %v810
        %816 = vmatprep.subr.bf16.mxu0 0
        %817 = vmatpush1.bf16.msra.mxu0 0
        %818 = vmatprep.subr.bf16.mxu0 0
        %819 = vmatpush1.bf16.msra.mxu0 0
        %820 = vmatprep.subr.bf16.mxu0 0
        %821 = vmatpush1.bf16.msra.mxu0 0
        %822 = vmatprep.subr.bf16.mxu0 0
        %823 = vmatpush1.bf16.msra.mxu0 0
        %824 = vmatprep.subr.bf16.mxu0 0
        %825 = vmatpush1.bf16.msra.mxu0 0
        %826 = vmatprep.subr.bf16.mxu0 0
        %827 = vmatpush1.bf16.msra.mxu0 0
        %828 = vmatprep.subr.bf16.mxu0 0
        %829 = vmatpush1.bf16.msra.mxu0 %v813
        %830 = vmatprep.subr.bf16.mxu0 0
        %831 = vmatpush1.bf16.msra.mxu0 %v812
        %832 = vmatprep.subr.bf16.mxu0 0
        %833 = vmatpush2.bf16.msra.mxu0 0
        %834 = vmatprep.subr.bf16.mxu0 0
        %835 = vmatpush2.bf16.msra.mxu0 0
        %836 = vmatprep.subr.bf16.mxu0 0
        %837 = vmatpush2.bf16.msra.mxu0 0
        %838 = vmatprep.subr.bf16.mxu0 0
        %839 = vmatpush2.bf16.msra.mxu0 0
        %840 = vmatprep.subr.bf16.mxu0 0
        %841 = vmatpush2.bf16.msra.mxu0 0
        %842 = vmatprep.subr.bf16.mxu0 0
        %843 = vmatpush2.bf16.msra.mxu0 0
        %844 = vmatprep.subr.bf16.mxu0 0
        %845 = vmatpush2.bf16.msra.mxu0 0
        %846 = vmatprep.subr.bf16.mxu0 0
        %847 = vmatpush2.bf16.msra.mxu0 0
        %848 = vmatprep.mubr.bf16.mxu0 0
        %849 = vmatmul.mubr.bf16.gmra.mxu0 %v606
        %v850 = vpop.f32.mrf.mxu0
        %v851 = vadd.f32 0.0, %v850
        %v852 = vpop.f32.mrf.mxu0
        %v853 = vpop.f32.mrf.mxu0
        %v854 = vpop.f32.mrf.mxu0
        %855 = vdwg.mxu0
        %v860 = vunpack.c.l.b16 %v533
        %v861 = vunpack.c.l.b16 %v534
        %v862 = vunpack.c.l.b16 %v535
        %v863 = vunpack.c.l.b16 %v536
        %v864 = vpack.c.b16 %v861, %v860
        %v865 = vpack.c.b16 %v863, %v862
        %868 = vmatprep.subr.bf16.mxu0 0
        %869 = vmatpush1.bf16.msra.mxu0 0
        %870 = vmatprep.subr.bf16.mxu0 0
        %871 = vmatpush1.bf16.msra.mxu0 0
        %872 = vmatprep.subr.bf16.mxu0 0
        %873 = vmatpush1.bf16.msra.mxu0 0
        %874 = vmatprep.subr.bf16.mxu0 0
        %875 = vmatpush1.bf16.msra.mxu0 0
        %876 = vmatprep.subr.bf16.mxu0 0
        %877 = vmatpush1.bf16.msra.mxu0 0
        %878 = vmatprep.subr.bf16.mxu0 0
        %879 = vmatpush1.bf16.msra.mxu0 0
        %880 = vmatprep.subr.bf16.mxu0 0
        %881 = vmatpush1.bf16.msra.mxu0 %v865
        %882 = vmatprep.subr.bf16.mxu0 0
        %883 = vmatpush1.bf16.msra.mxu0 %v864
        %884 = vmatprep.subr.bf16.mxu0 0
        %885 = vmatpush2.bf16.msra.mxu0 0
        %886 = vmatprep.subr.bf16.mxu0 0
        %887 = vmatpush2.bf16.msra.mxu0 0
        %888 = vmatprep.subr.bf16.mxu0 0
        %889 = vmatpush2.bf16.msra.mxu0 0
        %890 = vmatprep.subr.bf16.mxu0 0
        %891 = vmatpush2.bf16.msra.mxu0 0
        %892 = vmatprep.subr.bf16.mxu0 0
        %893 = vmatpush2.bf16.msra.mxu0 0
        %894 = vmatprep.subr.bf16.mxu0 0
        %895 = vmatpush2.bf16.msra.mxu0 0
        %896 = vmatprep.subr.bf16.mxu0 0
        %897 = vmatpush2.bf16.msra.mxu0 0
        %898 = vmatprep.subr.bf16.mxu0 0
        %899 = vmatpush2.bf16.msra.mxu0 0
        %900 = vmatprep.mubr.bf16.mxu0 0
        %901 = vmatmul.mubr.bf16.gmra.mxu0 %v606
        %v902 = vpop.f32.mrf.mxu0
        %v903 = vadd.f32 0.0, %v902
        %v904 = vpop.f32.mrf.mxu0
        %v905 = vpop.f32.mrf.mxu0
        %v906 = vpop.f32.mrf.mxu0
        %907 = vdwg.mxu0
        %v912 = vunpack.c.l.b16 %v537
        %v913 = vunpack.c.l.b16 %v538
        %v914 = vunpack.c.l.b16 %v539
        %v915 = vunpack.c.l.b16 %v540
        %v916 = vpack.c.b16 %v913, %v912
        %v917 = vpack.c.b16 %v915, %v914
        %920 = vmatprep.subr.bf16.mxu0 0
        %921 = vmatpush1.bf16.msra.mxu0 0
        %922 = vmatprep.subr.bf16.mxu0 0
        %923 = vmatpush1.bf16.msra.mxu0 0
        %924 = vmatprep.subr.bf16.mxu0 0
        %925 = vmatpush1.bf16.msra.mxu0 0
        %926 = vmatprep.subr.bf16.mxu0 0
        %927 = vmatpush1.bf16.msra.mxu0 0
        %928 = vmatprep.subr.bf16.mxu0 0
        %929 = vmatpush1.bf16.msra.mxu0 0
        %930 = vmatprep.subr.bf16.mxu0 0
        %931 = vmatpush1.bf16.msra.mxu0 0
        %932 = vmatprep.subr.bf16.mxu0 0
        %933 = vmatpush1.bf16.msra.mxu0 %v917
        %934 = vmatprep.subr.bf16.mxu0 0
        %935 = vmatpush1.bf16.msra.mxu0 %v916
        %936 = vmatprep.subr.bf16.mxu0 0
        %937 = vmatpush2.bf16.msra.mxu0 0
        %938 = vmatprep.subr.bf16.mxu0 0
        %939 = vmatpush2.bf16.msra.mxu0 0
        %940 = vmatprep.subr.bf16.mxu0 0
        %941 = vmatpush2.bf16.msra.mxu0 0
        %942 = vmatprep.subr.bf16.mxu0 0
        %943 = vmatpush2.bf16.msra.mxu0 0
        %944 = vmatprep.subr.bf16.mxu0 0
        %945 = vmatpush2.bf16.msra.mxu0 0
        %946 = vmatprep.subr.bf16.mxu0 0
        %947 = vmatpush2.bf16.msra.mxu0 0
        %948 = vmatprep.subr.bf16.mxu0 0
        %949 = vmatpush2.bf16.msra.mxu0 0
        %950 = vmatprep.subr.bf16.mxu0 0
        %951 = vmatpush2.bf16.msra.mxu0 0
        %952 = vmatprep.mubr.bf16.mxu0 0
        %953 = vmatmul.mubr.bf16.gmra.mxu0 %v606
        %v954 = vpop.f32.mrf.mxu0
        %v955 = vadd.f32 0.0, %v954
        %v956 = vpop.f32.mrf.mxu0
        %v957 = vpop.f32.mrf.mxu0
        %v958 = vpop.f32.mrf.mxu0
        %959 = vdwg.mxu0
        %v964 = vunpack.c.l.b16 %v541
        %v965 = vunpack.c.l.b16 %v542
        %v966 = vunpack.c.l.b16 %v543
        %v967 = vunpack.c.l.b16 %v544
        %v968 = vpack.c.b16 %v965, %v964
        %v969 = vpack.c.b16 %v967, %v966
        %972 = vmatprep.subr.bf16.mxu0 0
        %973 = vmatpush1.bf16.msra.mxu0 0
        %974 = vmatprep.subr.bf16.mxu0 0
        %975 = vmatpush1.bf16.msra.mxu0 0
        %976 = vmatprep.subr.bf16.mxu0 0
        %977 = vmatpush1.bf16.msra.mxu0 0
        %978 = vmatprep.subr.bf16.mxu0 0
        %979 = vmatpush1.bf16.msra.mxu0 0
        %980 = vmatprep.subr.bf16.mxu0 0
        %981 = vmatpush1.bf16.msra.mxu0 0
        %982 = vmatprep.subr.bf16.mxu0 0
        %983 = vmatpush1.bf16.msra.mxu0 0
        %984 = vmatprep.subr.bf16.mxu0 0
        %985 = vmatpush1.bf16.msra.mxu0 %v969
        %986 = vmatprep.subr.bf16.mxu0 0
        %987 = vmatpush1.bf16.msra.mxu0 %v968
        %988 = vmatprep.subr.bf16.mxu0 0
        %989 = vmatpush2.bf16.msra.mxu0 0
        %990 = vmatprep.subr.bf16.mxu0 0
        %991 = vmatpush2.bf16.msra.mxu0 0
        %992 = vmatprep.subr.bf16.mxu0 0
        %993 = vmatpush2.bf16.msra.mxu0 0
        %994 = vmatprep.subr.bf16.mxu0 0
        %995 = vmatpush2.bf16.msra.mxu0 0
        %996 = vmatprep.subr.bf16.mxu0 0
        %997 = vmatpush2.bf16.msra.mxu0 0
        %998 = vmatprep.subr.bf16.mxu0 0
        %999 = vmatpush2.bf16.msra.mxu0 0
        %1000 = vmatprep.subr.bf16.mxu0 0
        %1001 = vmatpush2.bf16.msra.mxu0 0
        %1002 = vmatprep.subr.bf16.mxu0 0
        %1003 = vmatpush2.bf16.msra.mxu0 0
        %1004 = vmatprep.mubr.bf16.mxu0 0
        %1005 = vmatmul.mubr.bf16.gmra.mxu0 %v606
        %v1006 = vpop.f32.mrf.mxu0
        %v1007 = vadd.f32 0.0, %v1006
        %v1008 = vpop.f32.mrf.mxu0
        %v1009 = vpop.f32.mrf.mxu0
        %v1010 = vpop.f32.mrf.mxu0
        %1011 = vdwg.mxu0
        %v1016 = vunpack.c.l.b16 %v545
        %v1017 = vunpack.c.l.b16 %v546
        %v1018 = vunpack.c.l.b16 %v547
        %v1019 = vunpack.c.l.b16 %v548
        %v1020 = vpack.c.b16 %v1017, %v1016
        %v1021 = vpack.c.b16 %v1019, %v1018
        %1024 = vmatprep.subr.bf16.mxu0 0
        %1025 = vmatpush1.bf16.msra.mxu0 0
        %1026 = vmatprep.subr.bf16.mxu0 0
        %1027 = vmatpush1.bf16.msra.mxu0 0
        %1028 = vmatprep.subr.bf16.mxu0 0
        %1029 = vmatpush1.bf16.msra.mxu0 0
        %1030 = vmatprep.subr.bf16.mxu0 0
        %1031 = vmatpush1.bf16.msra.mxu0 0
        %1032 = vmatprep.subr.bf16.mxu0 0
        %1033 = vmatpush1.bf16.msra.mxu0 0
        %1034 = vmatprep.subr.bf16.mxu0 0
        %1035 = vmatpush1.bf16.msra.mxu0 0
        %1036 = vmatprep.subr.bf16.mxu0 0
        %1037 = vmatpush1.bf16.msra.mxu0 %v1021
        %1038 = vmatprep.subr.bf16.mxu0 0
        %1039 = vmatpush1.bf16.msra.mxu0 %v1020
        %1040 = vmatprep.subr.bf16.mxu0 0
        %1041 = vmatpush2.bf16.msra.mxu0 0
        %1042 = vmatprep.subr.bf16.mxu0 0
        %1043 = vmatpush2.bf16.msra.mxu0 0
        %1044 = vmatprep.subr.bf16.mxu0 0
        %1045 = vmatpush2.bf16.msra.mxu0 0
        %1046 = vmatprep.subr.bf16.mxu0 0
        %1047 = vmatpush2.bf16.msra.mxu0 0
        %1048 = vmatprep.subr.bf16.mxu0 0
        %1049 = vmatpush2.bf16.msra.mxu0 0
        %1050 = vmatprep.subr.bf16.mxu0 0
        %1051 = vmatpush2.bf16.msra.mxu0 0
        %1052 = vmatprep.subr.bf16.mxu0 0
        %1053 = vmatpush2.bf16.msra.mxu0 0
        %1054 = vmatprep.subr.bf16.mxu0 0
        %1055 = vmatpush2.bf16.msra.mxu0 0
        %1056 = vmatprep.mubr.bf16.mxu0 0
        %1057 = vmatmul.mubr.bf16.gmra.mxu0 %v606
        %v1058 = vpop.f32.mrf.mxu0
        %v1059 = vadd.f32 0.0, %v1058
        %v1060 = vpop.f32.mrf.mxu0
        %v1061 = vpop.f32.mrf.mxu0
        %v1062 = vpop.f32.mrf.mxu0
        %1063 = vdwg.mxu0
        %v1068 = vunpack.c.l.b16 %v549
        %v1069 = vunpack.c.l.b16 %v550
        %v1070 = vunpack.c.l.b16 %v551
        %v1071 = vunpack.c.l.b16 %v552
        %v1072 = vpack.c.b16 %v1069, %v1068
        %v1073 = vpack.c.b16 %v1071, %v1070
        %1076 = vmatprep.subr.bf16.mxu0 0
        %1077 = vmatpush1.bf16.msra.mxu0 0
        %1078 = vmatprep.subr.bf16.mxu0 0
        %1079 = vmatpush1.bf16.msra.mxu0 0
        %1080 = vmatprep.subr.bf16.mxu0 0
        %1081 = vmatpush1.bf16.msra.mxu0 0
        %1082 = vmatprep.subr.bf16.mxu0 0
        %1083 = vmatpush1.bf16.msra.mxu0 0
        %1084 = vmatprep.subr.bf16.mxu0 0
        %1085 = vmatpush1.bf16.msra.mxu0 0
        %1086 = vmatprep.subr.bf16.mxu0 0
        %1087 = vmatpush1.bf16.msra.mxu0 0
        %1088 = vmatprep.subr.bf16.mxu0 0
        %1089 = vmatpush1.bf16.msra.mxu0 %v1073
        %1090 = vmatprep.subr.bf16.mxu0 0
        %1091 = vmatpush1.bf16.msra.mxu0 %v1072
        %1092 = vmatprep.subr.bf16.mxu0 0
        %1093 = vmatpush2.bf16.msra.mxu0 0
        %1094 = vmatprep.subr.bf16.mxu0 0
        %1095 = vmatpush2.bf16.msra.mxu0 0
        %1096 = vmatprep.subr.bf16.mxu0 0
        %1097 = vmatpush2.bf16.msra.mxu0 0
        %1098 = vmatprep.subr.bf16.mxu0 0
        %1099 = vmatpush2.bf16.msra.mxu0 0
        %1100 = vmatprep.subr.bf16.mxu0 0
        %1101 = vmatpush2.bf16.msra.mxu0 0
        %1102 = vmatprep.subr.bf16.mxu0 0
        %1103 = vmatpush2.bf16.msra.mxu0 0
        %1104 = vmatprep.subr.bf16.mxu0 0
        %1105 = vmatpush2.bf16.msra.mxu0 0
        %1106 = vmatprep.subr.bf16.mxu0 0
        %1107 = vmatpush2.bf16.msra.mxu0 0
        %1108 = vmatprep.mubr.bf16.mxu0 0
        %1109 = vmatmul.mubr.bf16.gmra.mxu0 %v606
        %v1110 = vpop.f32.mrf.mxu0
        %v1111 = vadd.f32 0.0, %v1110
        %v1112 = vpop.f32.mrf.mxu0
        %v1113 = vpop.f32.mrf.mxu0
        %v1114 = vpop.f32.mrf.mxu0
        %1115 = vdwg.mxu0
        %v1120 = vunpack.c.l.b16 %v553
        %v1121 = vunpack.c.l.b16 %v554
        %v1122 = vunpack.c.l.b16 %v555
        %v1123 = vunpack.c.l.b16 %v556
        %v1124 = vpack.c.b16 %v1121, %v1120
        %v1125 = vpack.c.b16 %v1123, %v1122
        %1128 = vmatprep.subr.bf16.mxu0 0
        %1129 = vmatpush1.bf16.msra.mxu0 0
        %1130 = vmatprep.subr.bf16.mxu0 0
        %1131 = vmatpush1.bf16.msra.mxu0 0
        %1132 = vmatprep.subr.bf16.mxu0 0
        %1133 = vmatpush1.bf16.msra.mxu0 0
        %1134 = vmatprep.subr.bf16.mxu0 0
        %1135 = vmatpush1.bf16.msra.mxu0 0
        %1136 = vmatprep.subr.bf16.mxu0 0
        %1137 = vmatpush1.bf16.msra.mxu0 0
        %1138 = vmatprep.subr.bf16.mxu0 0
        %1139 = vmatpush1.bf16.msra.mxu0 0
        %1140 = vmatprep.subr.bf16.mxu0 0
        %1141 = vmatpush1.bf16.msra.mxu0 %v1125
        %1142 = vmatprep.subr.bf16.mxu0 0
        %1143 = vmatpush1.bf16.msra.mxu0 %v1124
        %1144 = vmatprep.subr.bf16.mxu0 0
        %1145 = vmatpush2.bf16.msra.mxu0 0
        %1146 = vmatprep.subr.bf16.mxu0 0
        %1147 = vmatpush2.bf16.msra.mxu0 0
        %1148 = vmatprep.subr.bf16.mxu0 0
        %1149 = vmatpush2.bf16.msra.mxu0 0
        %1150 = vmatprep.subr.bf16.mxu0 0
        %1151 = vmatpush2.bf16.msra.mxu0 0
        %1152 = vmatprep.subr.bf16.mxu0 0
        %1153 = vmatpush2.bf16.msra.mxu0 0
        %1154 = vmatprep.subr.bf16.mxu0 0
        %1155 = vmatpush2.bf16.msra.mxu0 0
        %1156 = vmatprep.subr.bf16.mxu0 0
        %1157 = vmatpush2.bf16.msra.mxu0 0
        %1158 = vmatprep.subr.bf16.mxu0 0
        %1159 = vmatpush2.bf16.msra.mxu0 0
        %1160 = vmatprep.mubr.bf16.mxu0 0
        %1161 = vmatmul.mubr.bf16.gmra.mxu0 %v606
        %v1162 = vpop.f32.mrf.mxu0
        %v1163 = vadd.f32 0.0, %v1162
        %v1164 = vpop.f32.mrf.mxu0
        %v1165 = vpop.f32.mrf.mxu0
        %v1166 = vpop.f32.mrf.mxu0
        %1167 = vdwg.mxu0
        %v1172 = vunpack.c.l.b16 %v557
        %v1173 = vunpack.c.l.b16 %v558
        %v1174 = vunpack.c.l.b16 %v559
        %v1175 = vunpack.c.l.b16 %v560
        %v1176 = vpack.c.b16 %v1173, %v1172
        %v1177 = vpack.c.b16 %v1175, %v1174
        %1180 = vmatprep.subr.bf16.mxu0 0
        %1181 = vmatpush1.bf16.msra.mxu0 0
        %1182 = vmatprep.subr.bf16.mxu0 0
        %1183 = vmatpush1.bf16.msra.mxu0 0
        %1184 = vmatprep.subr.bf16.mxu0 0
        %1185 = vmatpush1.bf16.msra.mxu0 0
        %1186 = vmatprep.subr.bf16.mxu0 0
        %1187 = vmatpush1.bf16.msra.mxu0 0
        %1188 = vmatprep.subr.bf16.mxu0 0
        %1189 = vmatpush1.bf16.msra.mxu0 0
        %1190 = vmatprep.subr.bf16.mxu0 0
        %1191 = vmatpush1.bf16.msra.mxu0 0
        %1192 = vmatprep.subr.bf16.mxu0 0
        %1193 = vmatpush1.bf16.msra.mxu0 %v1177
        %1194 = vmatprep.subr.bf16.mxu0 0
        %1195 = vmatpush1.bf16.msra.mxu0 %v1176
        %1196 = vmatprep.subr.bf16.mxu0 0
        %1197 = vmatpush2.bf16.msra.mxu0 0
        %1198 = vmatprep.subr.bf16.mxu0 0
        %1199 = vmatpush2.bf16.msra.mxu0 0
        %1200 = vmatprep.subr.bf16.mxu0 0
        %1201 = vmatpush2.bf16.msra.mxu0 0
        %1202 = vmatprep.subr.bf16.mxu0 0
        %1203 = vmatpush2.bf16.msra.mxu0 0
        %1204 = vmatprep.subr.bf16.mxu0 0
        %1205 = vmatpush2.bf16.msra.mxu0 0
        %1206 = vmatprep.subr.bf16.mxu0 0
        %1207 = vmatpush2.bf16.msra.mxu0 0
        %1208 = vmatprep.subr.bf16.mxu0 0
        %1209 = vmatpush2.bf16.msra.mxu0 0
        %1210 = vmatprep.subr.bf16.mxu0 0
        %1211 = vmatpush2.bf16.msra.mxu0 0
        %1212 = vmatprep.mubr.bf16.mxu0 0
        %1213 = vmatmul.mubr.bf16.gmra.mxu0 %v606
        %v1214 = vpop.f32.mrf.mxu0
        %v1215 = vadd.f32 0.0, %v1214
        %v1216 = vpop.f32.mrf.mxu0
        %v1217 = vpop.f32.mrf.mxu0
        %v1218 = vpop.f32.mrf.mxu0
        %1219 = vdwg.mxu0
        %v1224 = vunpack.c.l.b16 %v561
        %v1225 = vunpack.c.l.b16 %v562
        %v1226 = vunpack.c.l.b16 %v563
        %v1227 = vunpack.c.l.b16 %v564
        %v1228 = vpack.c.b16 %v1225, %v1224
        %v1229 = vpack.c.b16 %v1227, %v1226
        %1232 = vmatprep.subr.bf16.mxu0 0
        %1233 = vmatpush1.bf16.msra.mxu0 0
        %1234 = vmatprep.subr.bf16.mxu0 0
        %1235 = vmatpush1.bf16.msra.mxu0 0
        %1236 = vmatprep.subr.bf16.mxu0 0
        %1237 = vmatpush1.bf16.msra.mxu0 0
        %1238 = vmatprep.subr.bf16.mxu0 0
        %1239 = vmatpush1.bf16.msra.mxu0 0
        %1240 = vmatprep.subr.bf16.mxu0 0
        %1241 = vmatpush1.bf16.msra.mxu0 0
        %1242 = vmatprep.subr.bf16.mxu0 0
        %1243 = vmatpush1.bf16.msra.mxu0 0
        %1244 = vmatprep.subr.bf16.mxu0 0
        %1245 = vmatpush1.bf16.msra.mxu0 %v1229
        %1246 = vmatprep.subr.bf16.mxu0 0
        %1247 = vmatpush1.bf16.msra.mxu0 %v1228
        %1248 = vmatprep.subr.bf16.mxu0 0
        %1249 = vmatpush2.bf16.msra.mxu0 0
        %1250 = vmatprep.subr.bf16.mxu0 0
        %1251 = vmatpush2.bf16.msra.mxu0 0
        %1252 = vmatprep.subr.bf16.mxu0 0
        %1253 = vmatpush2.bf16.msra.mxu0 0
        %1254 = vmatprep.subr.bf16.mxu0 0
        %1255 = vmatpush2.bf16.msra.mxu0 0
        %1256 = vmatprep.subr.bf16.mxu0 0
        %1257 = vmatpush2.bf16.msra.mxu0 0
        %1258 = vmatprep.subr.bf16.mxu0 0
        %1259 = vmatpush2.bf16.msra.mxu0 0
        %1260 = vmatprep.subr.bf16.mxu0 0
        %1261 = vmatpush2.bf16.msra.mxu0 0
        %1262 = vmatprep.subr.bf16.mxu0 0
        %1263 = vmatpush2.bf16.msra.mxu0 0
        %1264 = vmatprep.mubr.bf16.mxu0 0
        %1265 = vmatmul.mubr.bf16.gmra.mxu0 %v606
        %v1266 = vpop.f32.mrf.mxu0
        %v1267 = vadd.f32 0.0, %v1266
        %v1268 = vpop.f32.mrf.mxu0
        %v1269 = vpop.f32.mrf.mxu0
        %v1270 = vpop.f32.mrf.mxu0
        %1271 = vdwg.mxu0
        %v1276 = vunpack.c.l.b16 %v565
        %v1277 = vunpack.c.l.b16 %v566
        %v1278 = vunpack.c.l.b16 %v567
        %v1279 = vunpack.c.l.b16 %v568
        %v1280 = vpack.c.b16 %v1277, %v1276
        %v1281 = vpack.c.b16 %v1279, %v1278
        %1284 = vmatprep.subr.bf16.mxu0 0
        %1285 = vmatpush1.bf16.msra.mxu0 0
        %1286 = vmatprep.subr.bf16.mxu0 0
        %1287 = vmatpush1.bf16.msra.mxu0 0
        %1288 = vmatprep.subr.bf16.mxu0 0
        %1289 = vmatpush1.bf16.msra.mxu0 0
        %1290 = vmatprep.subr.bf16.mxu0 0
        %1291 = vmatpush1.bf16.msra.mxu0 0
        %1292 = vmatprep.subr.bf16.mxu0 0
        %1293 = vmatpush1.bf16.msra.mxu0 0
        %1294 = vmatprep.subr.bf16.mxu0 0
        %1295 = vmatpush1.bf16.msra.mxu0 0
        %1296 = vmatprep.subr.bf16.mxu0 0
        %1297 = vmatpush1.bf16.msra.mxu0 %v1281
        %1298 = vmatprep.subr.bf16.mxu0 0
        %1299 = vmatpush1.bf16.msra.mxu0 %v1280
        %1300 = vmatprep.subr.bf16.mxu0 0
        %1301 = vmatpush2.bf16.msra.mxu0 0
        %1302 = vmatprep.subr.bf16.mxu0 0
        %1303 = vmatpush2.bf16.msra.mxu0 0
        %1304 = vmatprep.subr.bf16.mxu0 0
        %1305 = vmatpush2.bf16.msra.mxu0 0
        %1306 = vmatprep.subr.bf16.mxu0 0
        %1307 = vmatpush2.bf16.msra.mxu0 0
        %1308 = vmatprep.subr.bf16.mxu0 0
        %1309 = vmatpush2.bf16.msra.mxu0 0
        %1310 = vmatprep.subr.bf16.mxu0 0
        %1311 = vmatpush2.bf16.msra.mxu0 0
        %1312 = vmatprep.subr.bf16.mxu0 0
        %1313 = vmatpush2.bf16.msra.mxu0 0
        %1314 = vmatprep.subr.bf16.mxu0 0
        %1315 = vmatpush2.bf16.msra.mxu0 0
        %1316 = vmatprep.mubr.bf16.mxu0 0
        %1317 = vmatmul.mubr.bf16.gmra.mxu0 %v606
        %v1318 = vpop.f32.mrf.mxu0
        %v1319 = vadd.f32 0.0, %v1318
        %v1320 = vpop.f32.mrf.mxu0
        %v1321 = vpop.f32.mrf.mxu0
        %v1322 = vpop.f32.mrf.mxu0
        %1323 = vdwg.mxu0
        %v1328 = vunpack.c.l.b16 %v569
        %v1329 = vunpack.c.l.b16 %v570
        %v1330 = vunpack.c.l.b16 %v571
        %v1331 = vunpack.c.l.b16 %v572
        %v1332 = vpack.c.b16 %v1329, %v1328
        %v1333 = vpack.c.b16 %v1331, %v1330
        %1336 = vmatprep.subr.bf16.mxu0 0
        %1337 = vmatpush1.bf16.msra.mxu0 0
        %1338 = vmatprep.subr.bf16.mxu0 0
        %1339 = vmatpush1.bf16.msra.mxu0 0
        %1340 = vmatprep.subr.bf16.mxu0 0
        %1341 = vmatpush1.bf16.msra.mxu0 0
        %1342 = vmatprep.subr.bf16.mxu0 0
        %1343 = vmatpush1.bf16.msra.mxu0 0
        %1344 = vmatprep.subr.bf16.mxu0 0
        %1345 = vmatpush1.bf16.msra.mxu0 0
        %1346 = vmatprep.subr.bf16.mxu0 0
        %1347 = vmatpush1.bf16.msra.mxu0 0
        %1348 = vmatprep.subr.bf16.mxu0 0
        %1349 = vmatpush1.bf16.msra.mxu0 %v1333
        %1350 = vmatprep.subr.bf16.mxu0 0
        %1351 = vmatpush1.bf16.msra.mxu0 %v1332
        %1352 = vmatprep.subr.bf16.mxu0 0
        %1353 = vmatpush2.bf16.msra.mxu0 0
        %1354 = vmatprep.subr.bf16.mxu0 0
        %1355 = vmatpush2.bf16.msra.mxu0 0
        %1356 = vmatprep.subr.bf16.mxu0 0
        %1357 = vmatpush2.bf16.msra.mxu0 0
        %1358 = vmatprep.subr.bf16.mxu0 0
        %1359 = vmatpush2.bf16.msra.mxu0 0
        %1360 = vmatprep.subr.bf16.mxu0 0
        %1361 = vmatpush2.bf16.msra.mxu0 0
        %1362 = vmatprep.subr.bf16.mxu0 0
        %1363 = vmatpush2.bf16.msra.mxu0 0
        %1364 = vmatprep.subr.bf16.mxu0 0
        %1365 = vmatpush2.bf16.msra.mxu0 0
        %1366 = vmatprep.subr.bf16.mxu0 0
        %1367 = vmatpush2.bf16.msra.mxu0 0
        %1368 = vmatprep.mubr.bf16.mxu0 0
        %1369 = vmatmul.mubr.bf16.gmra.mxu0 %v606
        %v1370 = vpop.f32.mrf.mxu0
        %v1371 = vadd.f32 0.0, %v1370
        %v1372 = vpop.f32.mrf.mxu0
        %v1373 = vpop.f32.mrf.mxu0
        %v1374 = vpop.f32.mrf.mxu0
        %1375 = vdwg.mxu0
        %v1380 = vunpack.c.l.b16 %v573
        %v1381 = vunpack.c.l.b16 %v574
        %v1382 = vunpack.c.l.b16 %v575
        %v1383 = vunpack.c.l.b16 %v576
        %v1384 = vpack.c.b16 %v1381, %v1380
        %v1385 = vpack.c.b16 %v1383, %v1382
        %1388 = vmatprep.subr.bf16.mxu0 0
        %1389 = vmatpush1.bf16.msra.mxu0 0
        %1390 = vmatprep.subr.bf16.mxu0 0
        %1391 = vmatpush1.bf16.msra.mxu0 0
        %1392 = vmatprep.subr.bf16.mxu0 0
        %1393 = vmatpush1.bf16.msra.mxu0 0
        %1394 = vmatprep.subr.bf16.mxu0 0
        %1395 = vmatpush1.bf16.msra.mxu0 0
        %1396 = vmatprep.subr.bf16.mxu0 0
        %1397 = vmatpush1.bf16.msra.mxu0 0
        %1398 = vmatprep.subr.bf16.mxu0 0
        %1399 = vmatpush1.bf16.msra.mxu0 0
        %1400 = vmatprep.subr.bf16.mxu0 0
        %1401 = vmatpush1.bf16.msra.mxu0 %v1385
        %1402 = vmatprep.subr.bf16.mxu0 0
        %1403 = vmatpush1.bf16.msra.mxu0 %v1384
        %1404 = vmatprep.subr.bf16.mxu0 0
        %1405 = vmatpush2.bf16.msra.mxu0 0
        %1406 = vmatprep.subr.bf16.mxu0 0
        %1407 = vmatpush2.bf16.msra.mxu0 0
        %1408 = vmatprep.subr.bf16.mxu0 0
        %1409 = vmatpush2.bf16.msra.mxu0 0
        %1410 = vmatprep.subr.bf16.mxu0 0
        %1411 = vmatpush2.bf16.msra.mxu0 0
        %1412 = vmatprep.subr.bf16.mxu0 0
        %1413 = vmatpush2.bf16.msra.mxu0 0
        %1414 = vmatprep.subr.bf16.mxu0 0
        %1415 = vmatpush2.bf16.msra.mxu0 0
        %1416 = vmatprep.subr.bf16.mxu0 0
        %1417 = vmatpush2.bf16.msra.mxu0 0
        %1418 = vmatprep.subr.bf16.mxu0 0
        %1419 = vmatpush2.bf16.msra.mxu0 0
        %1420 = vmatprep.mubr.bf16.mxu0 0
        %1421 = vmatmul.mubr.bf16.gmra.mxu0 %v606
        %v1422 = vpop.f32.mrf.mxu0
        %v1423 = vadd.f32 0.0, %v1422
        %v1424 = vpop.f32.mrf.mxu0
        %v1425 = vpop.f32.mrf.mxu0
        %v1426 = vpop.f32.mrf.mxu0
        %1427 = vdwg.mxu0
        %v1432 = vunpack.c.l.b16 %v577
        %v1433 = vunpack.c.l.b16 %v578
        %v1434 = vunpack.c.l.b16 %v579
        %v1435 = vunpack.c.l.b16 %v580
        %v1436 = vpack.c.b16 %v1433, %v1432
        %v1437 = vpack.c.b16 %v1435, %v1434
        %1440 = vmatprep.subr.bf16.mxu0 0
        %1441 = vmatpush1.bf16.msra.mxu0 0
        %1442 = vmatprep.subr.bf16.mxu0 0
        %1443 = vmatpush1.bf16.msra.mxu0 0
        %1444 = vmatprep.subr.bf16.mxu0 0
        %1445 = vmatpush1.bf16.msra.mxu0 0
        %1446 = vmatprep.subr.bf16.mxu0 0
        %1447 = vmatpush1.bf16.msra.mxu0 0
        %1448 = vmatprep.subr.bf16.mxu0 0
        %1449 = vmatpush1.bf16.msra.mxu0 0
        %1450 = vmatprep.subr.bf16.mxu0 0
        %1451 = vmatpush1.bf16.msra.mxu0 0
        %1452 = vmatprep.subr.bf16.mxu0 0
        %1453 = vmatpush1.bf16.msra.mxu0 %v1437
        %1454 = vmatprep.subr.bf16.mxu0 0
        %1455 = vmatpush1.bf16.msra.mxu0 %v1436
        %1456 = vmatprep.subr.bf16.mxu0 0
        %1457 = vmatpush2.bf16.msra.mxu0 0
        %1458 = vmatprep.subr.bf16.mxu0 0
        %1459 = vmatpush2.bf16.msra.mxu0 0
        %1460 = vmatprep.subr.bf16.mxu0 0
        %1461 = vmatpush2.bf16.msra.mxu0 0
        %1462 = vmatprep.subr.bf16.mxu0 0
        %1463 = vmatpush2.bf16.msra.mxu0 0
        %1464 = vmatprep.subr.bf16.mxu0 0
        %1465 = vmatpush2.bf16.msra.mxu0 0
        %1466 = vmatprep.subr.bf16.mxu0 0
        %1467 = vmatpush2.bf16.msra.mxu0 0
        %1468 = vmatprep.subr.bf16.mxu0 0
        %1469 = vmatpush2.bf16.msra.mxu0 0
        %1470 = vmatprep.subr.bf16.mxu0 0
        %1471 = vmatpush2.bf16.msra.mxu0 0
        %1472 = vmatprep.mubr.bf16.mxu0 0
        %1473 = vmatmul.mubr.bf16.gmra.mxu0 %v606
        %v1474 = vpop.f32.mrf.mxu0
        %v1475 = vadd.f32 0.0, %v1474
        %v1476 = vpop.f32.mrf.mxu0
        %v1477 = vpop.f32.mrf.mxu0
        %v1478 = vpop.f32.mrf.mxu0
        %1479 = vdwg.mxu0
        %v1484 = vunpack.c.l.b16 %v581
        %v1485 = vunpack.c.l.b16 %v582
        %v1486 = vunpack.c.l.b16 %v583
        %v1487 = vunpack.c.l.b16 %v584
        %v1488 = vpack.c.b16 %v1485, %v1484
        %v1489 = vpack.c.b16 %v1487, %v1486
        %1492 = vmatprep.subr.bf16.mxu0 0
        %1493 = vmatpush1.bf16.msra.mxu0 0
        %1494 = vmatprep.subr.bf16.mxu0 0
        %1495 = vmatpush1.bf16.msra.mxu0 0
        %1496 = vmatprep.subr.bf16.mxu0 0
        %1497 = vmatpush1.bf16.msra.mxu0 0
        %1498 = vmatprep.subr.bf16.mxu0 0
        %1499 = vmatpush1.bf16.msra.mxu0 0
        %1500 = vmatprep.subr.bf16.mxu0 0
        %1501 = vmatpush1.bf16.msra.mxu0 0
        %1502 = vmatprep.subr.bf16.mxu0 0
        %1503 = vmatpush1.bf16.msra.mxu0 0
        %1504 = vmatprep.subr.bf16.mxu0 0
        %1505 = vmatpush1.bf16.msra.mxu0 %v1489
        %1506 = vmatprep.subr.bf16.mxu0 0
        %1507 = vmatpush1.bf16.msra.mxu0 %v1488
        %1508 = vmatprep.subr.bf16.mxu0 0
        %1509 = vmatpush2.bf16.msra.mxu0 0
        %1510 = vmatprep.subr.bf16.mxu0 0
        %1511 = vmatpush2.bf16.msra.mxu0 0
        %1512 = vmatprep.subr.bf16.mxu0 0
        %1513 = vmatpush2.bf16.msra.mxu0 0
        %1514 = vmatprep.subr.bf16.mxu0 0
        %1515 = vmatpush2.bf16.msra.mxu0 0
        %1516 = vmatprep.subr.bf16.mxu0 0
        %1517 = vmatpush2.bf16.msra.mxu0 0
        %1518 = vmatprep.subr.bf16.mxu0 0
        %1519 = vmatpush2.bf16.msra.mxu0 0
        %1520 = vmatprep.subr.bf16.mxu0 0
        %1521 = vmatpush2.bf16.msra.mxu0 0
        %1522 = vmatprep.subr.bf16.mxu0 0
        %1523 = vmatpush2.bf16.msra.mxu0 0
        %1524 = vmatprep.mubr.bf16.mxu0 0
        %1525 = vmatmul.mubr.bf16.gmra.mxu0 %v606
        %v1526 = vpop.f32.mrf.mxu0
        %v1527 = vadd.f32 0.0, %v1526
        %v1528 = vpop.f32.mrf.mxu0
        %v1529 = vpop.f32.mrf.mxu0
        %v1530 = vpop.f32.mrf.mxu0
        %1531 = vdwg.mxu0
        %v1536 = vunpack.c.l.b16 %v585
        %v1537 = vunpack.c.l.b16 %v586
        %v1538 = vunpack.c.l.b16 %v587
        %v1539 = vunpack.c.l.b16 %v588
        %v1540 = vpack.c.b16 %v1537, %v1536
        %v1541 = vpack.c.b16 %v1539, %v1538
        %1544 = vmatprep.subr.bf16.mxu0 0
        %1545 = vmatpush1.bf16.msra.mxu0 0
        %1546 = vmatprep.subr.bf16.mxu0 0
        %1547 = vmatpush1.bf16.msra.mxu0 0
        %1548 = vmatprep.subr.bf16.mxu0 0
        %1549 = vmatpush1.bf16.msra.mxu0 0
        %1550 = vmatprep.subr.bf16.mxu0 0
        %1551 = vmatpush1.bf16.msra.mxu0 0
        %1552 = vmatprep.subr.bf16.mxu0 0
        %1553 = vmatpush1.bf16.msra.mxu0 0
        %1554 = vmatprep.subr.bf16.mxu0 0
        %1555 = vmatpush1.bf16.msra.mxu0 0
        %1556 = vmatprep.subr.bf16.mxu0 0
        %1557 = vmatpush1.bf16.msra.mxu0 %v1541
        %1558 = vmatprep.subr.bf16.mxu0 0
        %1559 = vmatpush1.bf16.msra.mxu0 %v1540
        %1560 = vmatprep.subr.bf16.mxu0 0
        %1561 = vmatpush2.bf16.msra.mxu0 0
        %1562 = vmatprep.subr.bf16.mxu0 0
        %1563 = vmatpush2.bf16.msra.mxu0 0
        %1564 = vmatprep.subr.bf16.mxu0 0
        %1565 = vmatpush2.bf16.msra.mxu0 0
        %1566 = vmatprep.subr.bf16.mxu0 0
        %1567 = vmatpush2.bf16.msra.mxu0 0
        %1568 = vmatprep.subr.bf16.mxu0 0
        %1569 = vmatpush2.bf16.msra.mxu0 0
        %1570 = vmatprep.subr.bf16.mxu0 0
        %1571 = vmatpush2.bf16.msra.mxu0 0
        %1572 = vmatprep.subr.bf16.mxu0 0
        %1573 = vmatpush2.bf16.msra.mxu0 0
        %1574 = vmatprep.subr.bf16.mxu0 0
        %1575 = vmatpush2.bf16.msra.mxu0 0
        %1576 = vmatprep.mubr.bf16.mxu0 0
        %1577 = vmatmul.mubr.bf16.gmra.mxu0 %v606
        %v1578 = vpop.f32.mrf.mxu0
        %v1579 = vadd.f32 0.0, %v1578
        %v1580 = vpop.f32.mrf.mxu0
        %v1581 = vpop.f32.mrf.mxu0
        %v1582 = vpop.f32.mrf.mxu0
        %1583 = vdwg.mxu0
        %v1588 = vunpack.c.l.b16 %v589
        %v1589 = vunpack.c.l.b16 %v590
        %v1590 = vunpack.c.l.b16 %v591
        %v1591 = vunpack.c.l.b16 %v592
        %v1592 = vpack.c.b16 %v1589, %v1588
        %v1593 = vpack.c.b16 %v1591, %v1590
        %1596 = vmatprep.subr.bf16.mxu0 0
        %1597 = vmatpush1.bf16.msra.mxu0 0
        %1598 = vmatprep.subr.bf16.mxu0 0
        %1599 = vmatpush1.bf16.msra.mxu0 0
        %1600 = vmatprep.subr.bf16.mxu0 0
        %1601 = vmatpush1.bf16.msra.mxu0 0
        %1602 = vmatprep.subr.bf16.mxu0 0
        %1603 = vmatpush1.bf16.msra.mxu0 0
        %1604 = vmatprep.subr.bf16.mxu0 0
        %1605 = vmatpush1.bf16.msra.mxu0 0
        %1606 = vmatprep.subr.bf16.mxu0 0
        %1607 = vmatpush1.bf16.msra.mxu0 0
        %1608 = vmatprep.subr.bf16.mxu0 0
        %1609 = vmatpush1.bf16.msra.mxu0 %v1593
        %1610 = vmatprep.subr.bf16.mxu0 0
        %1611 = vmatpush1.bf16.msra.mxu0 %v1592
        %1612 = vmatprep.subr.bf16.mxu0 0
        %1613 = vmatpush2.bf16.msra.mxu0 0
        %1614 = vmatprep.subr.bf16.mxu0 0
        %1615 = vmatpush2.bf16.msra.mxu0 0
        %1616 = vmatprep.subr.bf16.mxu0 0
        %1617 = vmatpush2.bf16.msra.mxu0 0
        %1618 = vmatprep.subr.bf16.mxu0 0
        %1619 = vmatpush2.bf16.msra.mxu0 0
        %1620 = vmatprep.subr.bf16.mxu0 0
        %1621 = vmatpush2.bf16.msra.mxu0 0
        %1622 = vmatprep.subr.bf16.mxu0 0
        %1623 = vmatpush2.bf16.msra.mxu0 0
        %1624 = vmatprep.subr.bf16.mxu0 0
        %1625 = vmatpush2.bf16.msra.mxu0 0
        %1626 = vmatprep.subr.bf16.mxu0 0
        %1627 = vmatpush2.bf16.msra.mxu0 0
        %1628 = vmatprep.mubr.bf16.mxu0 0
        %1629 = vmatmul.mubr.bf16.gmra.mxu0 %v606
        %v1630 = vpop.f32.mrf.mxu0
        %v1631 = vadd.f32 0.0, %v1630
        %v1632 = vpop.f32.mrf.mxu0
        %v1633 = vpop.f32.mrf.mxu0
        %v1634 = vpop.f32.mrf.mxu0
        %1635 = vdwg.mxu0
        %v1636 = vld [vmem:[#allocation7] sm:$0xff]
        %v1637 = vld [vmem:[#allocation8] sm:$0xff]
        %v1638 = vmul.f32 %v643, %v1636
        %v1639 = vmul.f32 %v695, %v1636
        %v1640 = vmul.f32 %v747, %v1636
        %v1641 = vmul.f32 %v799, %v1636
        %v1642 = vmul.f32 %v1267, %v1637
        %v1643 = vmul.f32 %v1319, %v1637
        %v1644 = vmul.f32 %v1371, %v1637
        %v1645 = vmul.f32 %v1423, %v1637
        %v1646 = vadd.f32 %v1638, %v1642
        %v1647 = vadd.f32 %v1639, %v1643
        %v1648 = vadd.f32 %v1640, %v1644
        %v1649 = vadd.f32 %v1641, %v1645
        %v1650 = vmul.f32 %v1646, 0.35355338
        %v1651 = vmul.f32 %v1647, 0.35355338
        %v1652 = vmul.f32 %v1648, 0.35355338
        %v1653 = vmul.f32 %v1649, 0.35355338
        %v1654 = vpack.c.bf16 %v1650, %v1650
        %v1655 = vpack.c.bf16 %v1651, %v1651
        %v1656 = vpack.c.bf16 %v1652, %v1652
        %v1657 = vpack.c.bf16 %v1653, %v1653
        %v1658 = vmul.f32 %v851, %v1636
        %v1659 = vmul.f32 %v903, %v1636
        %v1660 = vmul.f32 %v955, %v1636
        %v1661 = vmul.f32 %v1007, %v1636
        %v1662 = vmul.f32 %v1475, %v1637
        %v1663 = vmul.f32 %v1527, %v1637
        %v1664 = vmul.f32 %v1579, %v1637
        %v1665 = vmul.f32 %v1631, %v1637
        %v1666 = vadd.f32 %v1658, %v1662
        %v1667 = vadd.f32 %v1659, %v1663
        %v1668 = vadd.f32 %v1660, %v1664
        %v1669 = vadd.f32 %v1661, %v1665
        %v1670 = vpack.c.bf16 %v1666, %v1666
        %v1671 = vpack.c.bf16 %v1667, %v1667
        %v1672 = vpack.c.bf16 %v1668, %v1668
        %v1673 = vpack.c.bf16 %v1669, %v1669
        %v1674 = vpack.c.bf16 %v1059, %v1059
        %v1675 = vpack.c.bf16 %v1111, %v1111
        %v1676 = vpack.c.bf16 %v1163, %v1163
        %v1677 = vpack.c.bf16 %v1215, %v1215
        %vm1678 = vcmask 64512
        %v1680 = vsel %vm1678, %v1654, 0
        %v1683 = vsel %vm1678, %v1670, 0
        %1685 = vmatprep.subr.bf16.mxu0 0
        %1686 = vmatpush1.bf16.xpose.msra.mxu0 0
        %1687 = vmatprep.subr.bf16.mxu0 0
        %1688 = vmatpush1.bf16.xpose.msra.mxu0 0
        %1689 = vmatprep.subr.bf16.mxu0 0
        %1690 = vmatpush1.bf16.xpose.msra.mxu0 0
        %1691 = vmatprep.subr.bf16.mxu0 0
        %1692 = vmatpush1.bf16.xpose.msra.mxu0 0
        %1693 = vmatprep.subr.bf16.mxu0 0
        %1694 = vmatpush1.bf16.xpose.msra.mxu0 0
        %1695 = vmatprep.subr.bf16.mxu0 0
        %1696 = vmatpush1.bf16.xpose.msra.mxu0 0
        %1697 = vmatprep.subr.bf16.mxu0 0
        %1698 = vmatpush1.bf16.xpose.msra.mxu0 0
        %1699 = vmatprep.subr.bf16.mxu0 0
        %1700 = vmatpush1.bf16.xpose.msra.mxu0 %v1683
        %1701 = vmatprep.subr.bf16.mxu0 0
        %1702 = vmatpush2.bf16.xpose.msra.mxu0 0
        %1703 = vmatprep.subr.bf16.mxu0 0
        %1704 = vmatpush2.bf16.xpose.msra.mxu0 0
        %1705 = vmatprep.subr.bf16.mxu0 0
        %1706 = vmatpush2.bf16.xpose.msra.mxu0 0
        %1707 = vmatprep.subr.bf16.mxu0 0
        %1708 = vmatpush2.bf16.xpose.msra.mxu0 0
        %1709 = vmatprep.subr.bf16.mxu0 0
        %1710 = vmatpush2.bf16.xpose.msra.mxu0 0
        %1711 = vmatprep.subr.bf16.mxu0 0
        %1712 = vmatpush2.bf16.xpose.msra.mxu0 0
        %1713 = vmatprep.subr.bf16.mxu0 0
        %1714 = vmatpush2.bf16.xpose.msra.mxu0 0
        %1715 = vmatprep.subr.bf16.mxu0 0
        %1716 = vmatpush2.bf16.xpose.msra.mxu0 0
        %1717 = vmatprep.mubr.bf16.mxu0 0
        %1718 = vmatmul.mubr.bf16.gmra.mxu0 %v1680
        %v1719 = vpop.f32.mrf.mxu0
        %v1720 = vadd.f32 %v493, %v1719
        %v1721 = vpop.f32.mrf.mxu0
        %v1722 = vpop.f32.mrf.mxu0
        %v1723 = vpop.f32.mrf.mxu0
        %1724 = vdwg.mxu0
        %v1726 = vsel %vm1678, %v1655, 0
        %v1729 = vsel %vm1678, %v1671, 0
        %1731 = vmatprep.subr.bf16.mxu0 0
        %1732 = vmatpush1.bf16.xpose.msra.mxu0 0
        %1733 = vmatprep.subr.bf16.mxu0 0
        %1734 = vmatpush1.bf16.xpose.msra.mxu0 0
        %1735 = vmatprep.subr.bf16.mxu0 0
        %1736 = vmatpush1.bf16.xpose.msra.mxu0 0
        %1737 = vmatprep.subr.bf16.mxu0 0
        %1738 = vmatpush1.bf16.xpose.msra.mxu0 0
        %1739 = vmatprep.subr.bf16.mxu0 0
        %1740 = vmatpush1.bf16.xpose.msra.mxu0 0
        %1741 = vmatprep.subr.bf16.mxu0 0
        %1742 = vmatpush1.bf16.xpose.msra.mxu0 0
        %1743 = vmatprep.subr.bf16.mxu0 0
        %1744 = vmatpush1.bf16.xpose.msra.mxu0 0
        %1745 = vmatprep.subr.bf16.mxu0 0
        %1746 = vmatpush1.bf16.xpose.msra.mxu0 %v1729
        %1747 = vmatprep.subr.bf16.mxu0 0
        %1748 = vmatpush2.bf16.xpose.msra.mxu0 0
        %1749 = vmatprep.subr.bf16.mxu0 0
        %1750 = vmatpush2.bf16.xpose.msra.mxu0 0
        %1751 = vmatprep.subr.bf16.mxu0 0
        %1752 = vmatpush2.bf16.xpose.msra.mxu0 0
        %1753 = vmatprep.subr.bf16.mxu0 0
        %1754 = vmatpush2.bf16.xpose.msra.mxu0 0
        %1755 = vmatprep.subr.bf16.mxu0 0
        %1756 = vmatpush2.bf16.xpose.msra.mxu0 0
        %1757 = vmatprep.subr.bf16.mxu0 0
        %1758 = vmatpush2.bf16.xpose.msra.mxu0 0
        %1759 = vmatprep.subr.bf16.mxu0 0
        %1760 = vmatpush2.bf16.xpose.msra.mxu0 0
        %1761 = vmatprep.subr.bf16.mxu0 0
        %1762 = vmatpush2.bf16.xpose.msra.mxu0 0
        %1763 = vmatprep.mubr.bf16.mxu0 0
        %1764 = vmatmul.mubr.bf16.gmra.mxu0 %v1726
        %v1765 = vpop.f32.mrf.mxu0
        %v1766 = vadd.f32 %v493, %v1765
        %v1767 = vpop.f32.mrf.mxu0
        %v1768 = vpop.f32.mrf.mxu0
        %v1769 = vpop.f32.mrf.mxu0
        %1770 = vdwg.mxu0
        %v1772 = vsel %vm1678, %v1656, 0
        %v1775 = vsel %vm1678, %v1672, 0
        %1777 = vmatprep.subr.bf16.mxu0 0
        %1778 = vmatpush1.bf16.xpose.msra.mxu0 0
        %1779 = vmatprep.subr.bf16.mxu0 0
        %1780 = vmatpush1.bf16.xpose.msra.mxu0 0
        %1781 = vmatprep.subr.bf16.mxu0 0
        %1782 = vmatpush1.bf16.xpose.msra.mxu0 0
        %1783 = vmatprep.subr.bf16.mxu0 0
        %1784 = vmatpush1.bf16.xpose.msra.mxu0 0
        %1785 = vmatprep.subr.bf16.mxu0 0
        %1786 = vmatpush1.bf16.xpose.msra.mxu0 0
        %1787 = vmatprep.subr.bf16.mxu0 0
        %1788 = vmatpush1.bf16.xpose.msra.mxu0 0
        %1789 = vmatprep.subr.bf16.mxu0 0
        %1790 = vmatpush1.bf16.xpose.msra.mxu0 0
        %1791 = vmatprep.subr.bf16.mxu0 0
        %1792 = vmatpush1.bf16.xpose.msra.mxu0 %v1775
        %1793 = vmatprep.subr.bf16.mxu0 0
        %1794 = vmatpush2.bf16.xpose.msra.mxu0 0
        %1795 = vmatprep.subr.bf16.mxu0 0
        %1796 = vmatpush2.bf16.xpose.msra.mxu0 0
        %1797 = vmatprep.subr.bf16.mxu0 0
        %1798 = vmatpush2.bf16.xpose.msra.mxu0 0
        %1799 = vmatprep.subr.bf16.mxu0 0
        %1800 = vmatpush2.bf16.xpose.msra.mxu0 0
        %1801 = vmatprep.subr.bf16.mxu0 0
        %1802 = vmatpush2.bf16.xpose.msra.mxu0 0
        %1803 = vmatprep.subr.bf16.mxu0 0
        %1804 = vmatpush2.bf16.xpose.msra.mxu0 0
        %1805 = vmatprep.subr.bf16.mxu0 0
        %1806 = vmatpush2.bf16.xpose.msra.mxu0 0
        %1807 = vmatprep.subr.bf16.mxu0 0
        %1808 = vmatpush2.bf16.xpose.msra.mxu0 0
        %1809 = vmatprep.mubr.bf16.mxu0 0
        %1810 = vmatmul.mubr.bf16.gmra.mxu0 %v1772
        %v1811 = vpop.f32.mrf.mxu0
        %v1812 = vadd.f32 %v493, %v1811
        %v1813 = vpop.f32.mrf.mxu0
        %v1814 = vpop.f32.mrf.mxu0
        %v1815 = vpop.f32.mrf.mxu0
        %1816 = vdwg.mxu0
        %v1818 = vsel %vm1678, %v1657, 0
        %v1821 = vsel %vm1678, %v1673, 0
        %1823 = vmatprep.subr.bf16.mxu0 0
        %1824 = vmatpush1.bf16.xpose.msra.mxu0 0
        %1825 = vmatprep.subr.bf16.mxu0 0
        %1826 = vmatpush1.bf16.xpose.msra.mxu0 0
        %1827 = vmatprep.subr.bf16.mxu0 0
        %1828 = vmatpush1.bf16.xpose.msra.mxu0 0
        %1829 = vmatprep.subr.bf16.mxu0 0
        %1830 = vmatpush1.bf16.xpose.msra.mxu0 0
        %1831 = vmatprep.subr.bf16.mxu0 0
        %1832 = vmatpush1.bf16.xpose.msra.mxu0 0
        %1833 = vmatprep.subr.bf16.mxu0 0
        %1834 = vmatpush1.bf16.xpose.msra.mxu0 0
        %1835 = vmatprep.subr.bf16.mxu0 0
        %1836 = vmatpush1.bf16.xpose.msra.mxu0 0
        %1837 = vmatprep.subr.bf16.mxu0 0
        %1838 = vmatpush1.bf16.xpose.msra.mxu0 %v1821
        %1839 = vmatprep.subr.bf16.mxu0 0
        %1840 = vmatpush2.bf16.xpose.msra.mxu0 0
        %1841 = vmatprep.subr.bf16.mxu0 0
        %1842 = vmatpush2.bf16.xpose.msra.mxu0 0
        %1843 = vmatprep.subr.bf16.mxu0 0
        %1844 = vmatpush2.bf16.xpose.msra.mxu0 0
        %1845 = vmatprep.subr.bf16.mxu0 0
        %1846 = vmatpush2.bf16.xpose.msra.mxu0 0
        %1847 = vmatprep.subr.bf16.mxu0 0
        %1848 = vmatpush2.bf16.xpose.msra.mxu0 0
        %1849 = vmatprep.subr.bf16.mxu0 0
        %1850 = vmatpush2.bf16.xpose.msra.mxu0 0
        %1851 = vmatprep.subr.bf16.mxu0 0
        %1852 = vmatpush2.bf16.xpose.msra.mxu0 0
        %1853 = vmatprep.subr.bf16.mxu0 0
        %1854 = vmatpush2.bf16.xpose.msra.mxu0 0
        %1855 = vmatprep.mubr.bf16.mxu0 0
        %1856 = vmatmul.mubr.bf16.gmra.mxu0 %v1818
        %v1857 = vpop.f32.mrf.mxu0
        %v1858 = vadd.f32 %v493, %v1857
        %v1859 = vpop.f32.mrf.mxu0
        %v1860 = vpop.f32.mrf.mxu0
        %v1861 = vpop.f32.mrf.mxu0
        %1862 = vdwg.mxu0
        %v1863 = vsel %vm1678, %v1720, -inf
        %1864 = vmax.xlane.f32.xlu0 %v1863
        %v1865 = vpop.xlane.xlu0 %1864
        %v1866 = vsel %vm1678, %v1766, -inf
        %1867 = vmax.xlane.f32.xlu0 %v1866
        %v1868 = vpop.xlane.xlu0 %1867
        %v1869 = vsel %vm1678, %v1812, -inf
        %1870 = vmax.xlane.f32.xlu0 %v1869
        %v1871 = vpop.xlane.xlu0 %1870
        %v1872 = vsel %vm1678, %v1858, -inf
        %1873 = vmax.xlane.f32.xlu0 %v1872
        %v1874 = vpop.xlane.xlu0 %1873
        %v1875 = vsub.f32 %v1720, %v1865
        %v1876 = vsub.f32 %v1766, %v1868
        %v1877 = vsub.f32 %v1812, %v1871
        %v1878 = vsub.f32 %v1858, %v1874
        %v1879 = vmul.f32 %v1875, 1.442695
        %v1880 = vpow.pop %v1879
        %v1881 = vmul.f32 %v1876, 1.442695
        %v1882 = vpow.pop %v1881
        %v1883 = vmul.f32 %v1877, 1.442695
        %v1884 = vpow.pop %v1883
        %v1885 = vmul.f32 %v1878, 1.442695
        %v1886 = vpow.pop %v1885
        %v1887 = vsel %vm1678, %v1880, 0.0
        %1888 = vadd.xlane.f32.xlu0 %v1887
        %v1889 = vpop.xlane.xlu0 %1888
        %v1890 = vsel %vm1678, %v1882, 0.0
        %1891 = vadd.xlane.f32.xlu0 %v1890
        %v1892 = vpop.xlane.xlu0 %1891
        %v1893 = vsel %vm1678, %v1884, 0.0
        %1894 = vadd.xlane.f32.xlu0 %v1893
        %v1895 = vpop.xlane.xlu0 %1894
        %v1896 = vsel %vm1678, %v1886, 0.0
        %1897 = vadd.xlane.f32.xlu0 %v1896
        %v1898 = vpop.xlane.xlu0 %1897
        %v1899 = vrcp.pop %v1889
        %v1900 = vrcp.pop %v1892
        %v1901 = vrcp.pop %v1895
        %v1902 = vrcp.pop %v1898
        %v1903 = vmul.f32 %v1880, %v1899
        %v1904 = vmul.f32 %v1882, %v1900
        %v1905 = vmul.f32 %v1884, %v1901
        %v1906 = vmul.f32 %v1886, %v1902
        %v1907 = vpack.c.bf16 %v1903, %v1903
        %v1908 = vpack.c.bf16 %v1904, %v1904
        %v1909 = vpack.c.bf16 %v1905, %v1905
        %v1910 = vpack.c.bf16 %v1906, %v1906
        %v1912 = vsel %vm1678, %v1907, 0
        %vm1914 = vcmask 1043456
        %v1916 = vsel %vm1914, %v1674, 0
        %1918 = vmatprep.subr.bf16.mxu0 0
        %1919 = vmatpush1.bf16.msra.mxu0 0
        %1920 = vmatprep.subr.bf16.mxu0 0
        %1921 = vmatpush1.bf16.msra.mxu0 0
        %1922 = vmatprep.subr.bf16.mxu0 0
        %1923 = vmatpush1.bf16.msra.mxu0 0
        %1924 = vmatprep.subr.bf16.mxu0 0
        %1925 = vmatpush1.bf16.msra.mxu0 0
        %1926 = vmatprep.subr.bf16.mxu0 0
        %1927 = vmatpush1.bf16.msra.mxu0 0
        %1928 = vmatprep.subr.bf16.mxu0 0
        %1929 = vmatpush1.bf16.msra.mxu0 0
        %1930 = vmatprep.subr.bf16.mxu0 0
        %1931 = vmatpush1.bf16.msra.mxu0 0
        %1932 = vmatprep.subr.bf16.mxu0 0
        %1933 = vmatpush1.bf16.msra.mxu0 %v1916
        %1934 = vmatprep.subr.bf16.mxu0 0
        %1935 = vmatpush2.bf16.msra.mxu0 0
        %1936 = vmatprep.subr.bf16.mxu0 0
        %1937 = vmatpush2.bf16.msra.mxu0 0
        %1938 = vmatprep.subr.bf16.mxu0 0
        %1939 = vmatpush2.bf16.msra.mxu0 0
        %1940 = vmatprep.subr.bf16.mxu0 0
        %1941 = vmatpush2.bf16.msra.mxu0 0
        %1942 = vmatprep.subr.bf16.mxu0 0
        %1943 = vmatpush2.bf16.msra.mxu0 0
        %1944 = vmatprep.subr.bf16.mxu0 0
        %1945 = vmatpush2.bf16.msra.mxu0 0
        %1946 = vmatprep.subr.bf16.mxu0 0
        %1947 = vmatpush2.bf16.msra.mxu0 0
        %1948 = vmatprep.subr.bf16.mxu0 0
        %1949 = vmatpush2.bf16.msra.mxu0 0
        %1950 = vmatprep.mubr.bf16.mxu0 0
        %1951 = vmatmul.mubr.bf16.gmra.mxu0 %v1912
        %v1952 = vpop.f32.mrf.mxu0
        %v1953 = vadd.f32 0.0, %v1952
        %v1954 = vpop.f32.mrf.mxu0
        %v1955 = vpop.f32.mrf.mxu0
        %v1956 = vpop.f32.mrf.mxu0
        %1957 = vdwg.mxu0
        %v1959 = vsel %vm1678, %v1908, 0
        %v1962 = vsel %vm1914, %v1675, 0
        %1964 = vmatprep.subr.bf16.mxu0 0
        %1965 = vmatpush1.bf16.msra.mxu0 0
        %1966 = vmatprep.subr.bf16.mxu0 0
        %1967 = vmatpush1.bf16.msra.mxu0 0
        %1968 = vmatprep.subr.bf16.mxu0 0
        %1969 = vmatpush1.bf16.msra.mxu0 0
        %1970 = vmatprep.subr.bf16.mxu0 0
        %1971 = vmatpush1.bf16.msra.mxu0 0
        %1972 = vmatprep.subr.bf16.mxu0 0
        %1973 = vmatpush1.bf16.msra.mxu0 0
        %1974 = vmatprep.subr.bf16.mxu0 0
        %1975 = vmatpush1.bf16.msra.mxu0 0
        %1976 = vmatprep.subr.bf16.mxu0 0
        %1977 = vmatpush1.bf16.msra.mxu0 0
        %1978 = vmatprep.subr.bf16.mxu0 0
        %1979 = vmatpush1.bf16.msra.mxu0 %v1962
        %1980 = vmatprep.subr.bf16.mxu0 0
        %1981 = vmatpush2.bf16.msra.mxu0 0
        %1982 = vmatprep.subr.bf16.mxu0 0
        %1983 = vmatpush2.bf16.msra.mxu0 0
        %1984 = vmatprep.subr.bf16.mxu0 0
        %1985 = vmatpush2.bf16.msra.mxu0 0
        %1986 = vmatprep.subr.bf16.mxu0 0
        %1987 = vmatpush2.bf16.msra.mxu0 0
        %1988 = vmatprep.subr.bf16.mxu0 0
        %1989 = vmatpush2.bf16.msra.mxu0 0
        %1990 = vmatprep.subr.bf16.mxu0 0
        %1991 = vmatpush2.bf16.msra.mxu0 0
        %1992 = vmatprep.subr.bf16.mxu0 0
        %1993 = vmatpush2.bf16.msra.mxu0 0
        %1994 = vmatprep.subr.bf16.mxu0 0
        %1995 = vmatpush2.bf16.msra.mxu0 0
        %1996 = vmatprep.mubr.bf16.mxu0 0
        %1997 = vmatmul.mubr.bf16.gmra.mxu0 %v1959
        %v1998 = vpop.f32.mrf.mxu0
        %v1999 = vadd.f32 0.0, %v1998
        %v2000 = vpop.f32.mrf.mxu0
        %v2001 = vpop.f32.mrf.mxu0
        %v2002 = vpop.f32.mrf.mxu0
        %2003 = vdwg.mxu0
        %v2005 = vsel %vm1678, %v1909, 0
        %v2008 = vsel %vm1914, %v1676, 0
        %2010 = vmatprep.subr.bf16.mxu0 0
        %2011 = vmatpush1.bf16.msra.mxu0 0
        %2012 = vmatprep.subr.bf16.mxu0 0
        %2013 = vmatpush1.bf16.msra.mxu0 0
        %2014 = vmatprep.subr.bf16.mxu0 0
        %2015 = vmatpush1.bf16.msra.mxu0 0
        %2016 = vmatprep.subr.bf16.mxu0 0
        %2017 = vmatpush1.bf16.msra.mxu0 0
        %2018 = vmatprep.subr.bf16.mxu0 0
        %2019 = vmatpush1.bf16.msra.mxu0 0
        %2020 = vmatprep.subr.bf16.mxu0 0
        %2021 = vmatpush1.bf16.msra.mxu0 0
        %2022 = vmatprep.subr.bf16.mxu0 0
        %2023 = vmatpush1.bf16.msra.mxu0 0
        %2024 = vmatprep.subr.bf16.mxu0 0
        %2025 = vmatpush1.bf16.msra.mxu0 %v2008
        %2026 = vmatprep.subr.bf16.mxu0 0
        %2027 = vmatpush2.bf16.msra.mxu0 0
        %2028 = vmatprep.subr.bf16.mxu0 0
        %2029 = vmatpush2.bf16.msra.mxu0 0
        %2030 = vmatprep.subr.bf16.mxu0 0
        %2031 = vmatpush2.bf16.msra.mxu0 0
        %2032 = vmatprep.subr.bf16.mxu0 0
        %2033 = vmatpush2.bf16.msra.mxu0 0
        %2034 = vmatprep.subr.bf16.mxu0 0
        %2035 = vmatpush2.bf16.msra.mxu0 0
        %2036 = vmatprep.subr.bf16.mxu0 0
        %2037 = vmatpush2.bf16.msra.mxu0 0
        %2038 = vmatprep.subr.bf16.mxu0 0
        %2039 = vmatpush2.bf16.msra.mxu0 0
        %2040 = vmatprep.subr.bf16.mxu0 0
        %2041 = vmatpush2.bf16.msra.mxu0 0
        %2042 = vmatprep.mubr.bf16.mxu0 0
        %2043 = vmatmul.mubr.bf16.gmra.mxu0 %v2005
        %v2044 = vpop.f32.mrf.mxu0
        %v2045 = vadd.f32 0.0, %v2044
        %v2046 = vpop.f32.mrf.mxu0
        %v2047 = vpop.f32.mrf.mxu0
        %v2048 = vpop.f32.mrf.mxu0
        %2049 = vdwg.mxu0
        %v2051 = vsel %vm1678, %v1910, 0
        %v2054 = vsel %vm1914, %v1677, 0
        %2056 = vmatprep.subr.bf16.mxu0 0
        %2057 = vmatpush1.bf16.msra.mxu0 0
        %2058 = vmatprep.subr.bf16.mxu0 0
        %2059 = vmatpush1.bf16.msra.mxu0 0
        %2060 = vmatprep.subr.bf16.mxu0 0
        %2061 = vmatpush1.bf16.msra.mxu0 0
        %2062 = vmatprep.subr.bf16.mxu0 0
        %2063 = vmatpush1.bf16.msra.mxu0 0
        %2064 = vmatprep.subr.bf16.mxu0 0
        %2065 = vmatpush1.bf16.msra.mxu0 0
        %2066 = vmatprep.subr.bf16.mxu0 0
        %2067 = vmatpush1.bf16.msra.mxu0 0
        %2068 = vmatprep.subr.bf16.mxu0 0
        %2069 = vmatpush1.bf16.msra.mxu0 0
        %2070 = vmatprep.subr.bf16.mxu0 0
        %2071 = vmatpush1.bf16.msra.mxu0 %v2054
        %2072 = vmatprep.subr.bf16.mxu0 0
        %2073 = vmatpush2.bf16.msra.mxu0 0
        %2074 = vmatprep.subr.bf16.mxu0 0
        %2075 = vmatpush2.bf16.msra.mxu0 0
        %2076 = vmatprep.subr.bf16.mxu0 0
        %2077 = vmatpush2.bf16.msra.mxu0 0
        %2078 = vmatprep.subr.bf16.mxu0 0
        %2079 = vmatpush2.bf16.msra.mxu0 0
        %2080 = vmatprep.subr.bf16.mxu0 0
        %2081 = vmatpush2.bf16.msra.mxu0 0
        %2082 = vmatprep.subr.bf16.mxu0 0
        %2083 = vmatpush2.bf16.msra.mxu0 0
        %2084 = vmatprep.subr.bf16.mxu0 0
        %2085 = vmatpush2.bf16.msra.mxu0 0
        %2086 = vmatprep.subr.bf16.mxu0 0
        %2087 = vmatpush2.bf16.msra.mxu0 0
        %2088 = vmatprep.mubr.bf16.mxu0 0
        %2089 = vmatmul.mubr.bf16.gmra.mxu0 %v2051
        %v2090 = vpop.f32.mrf.mxu0
        %v2091 = vadd.f32 0.0, %v2090
        %v2092 = vpop.f32.mrf.mxu0
        %v2093 = vpop.f32.mrf.mxu0
        %v2094 = vpop.f32.mrf.mxu0
        %2095 = vdwg.mxu0
        %v2096 = vpack.c.bf16 %v1953, %v1953
        %v2097 = vpack.c.bf16 %v1999, %v1999
        %v2098 = vpack.c.bf16 %v2045, %v2045
        %v2099 = vpack.c.bf16 %v2091, %v2091
        %v2100 = vld [vmem:[%s6] sm:$0xf]
        %v2101 = vld [vmem:[%s6 + $0x4] sm:$0xf]
        %v2102 = vld [vmem:[%s6 + $0x8] sm:$0xf]
        %v2103 = vld [vmem:[%s6 + $0xc] sm:$0xf]
        %v2105 = vsel %vm1678, %v2096, 0
        %v2108 = vsel %vm1914, %v2100, 0
        %2110 = vmatprep.subr.bf16.mxu0 0
        %2111 = vmatpush1.bf16.msra.mxu0 0
        %2112 = vmatprep.subr.bf16.mxu0 0
        %2113 = vmatpush1.bf16.msra.mxu0 0
        %2114 = vmatprep.subr.bf16.mxu0 0
        %2115 = vmatpush1.bf16.msra.mxu0 0
        %2116 = vmatprep.subr.bf16.mxu0 0
        %2117 = vmatpush1.bf16.msra.mxu0 0
        %2118 = vmatprep.subr.bf16.mxu0 0
        %2119 = vmatpush1.bf16.msra.mxu0 0
        %2120 = vmatprep.subr.bf16.mxu0 0
        %2121 = vmatpush1.bf16.msra.mxu0 0
        %2122 = vmatprep.subr.bf16.mxu0 0
        %2123 = vmatpush1.bf16.msra.mxu0 0
        %2124 = vmatprep.subr.bf16.mxu0 0
        %2125 = vmatpush1.bf16.msra.mxu0 %v2108
        %2126 = vmatprep.subr.bf16.mxu0 0
        %2127 = vmatpush2.bf16.msra.mxu0 0
        %2128 = vmatprep.subr.bf16.mxu0 0
        %2129 = vmatpush2.bf16.msra.mxu0 0
        %2130 = vmatprep.subr.bf16.mxu0 0
        %2131 = vmatpush2.bf16.msra.mxu0 0
        %2132 = vmatprep.subr.bf16.mxu0 0
        %2133 = vmatpush2.bf16.msra.mxu0 0
        %2134 = vmatprep.subr.bf16.mxu0 0
        %2135 = vmatpush2.bf16.msra.mxu0 0
        %2136 = vmatprep.subr.bf16.mxu0 0
        %2137 = vmatpush2.bf16.msra.mxu0 0
        %2138 = vmatprep.subr.bf16.mxu0 0
        %2139 = vmatpush2.bf16.msra.mxu0 0
        %2140 = vmatprep.subr.bf16.mxu0 0
        %2141 = vmatpush2.bf16.msra.mxu0 0
        %2142 = vmatprep.mubr.bf16.mxu0 0
        %2143 = vmatmul.mubr.bf16.gmra.mxu0 %v2105
        %v2144 = vpop.f32.mrf.mxu0
        %v2145 = vadd.f32 0.0, %v2144
        %v2146 = vpop.f32.mrf.mxu0
        %v2147 = vpop.f32.mrf.mxu0
        %v2148 = vpop.f32.mrf.mxu0
        %2149 = vdwg.mxu0
        %v2151 = vsel %vm1678, %v2097, 0
        %v2154 = vsel %vm1914, %v2101, 0
        %2156 = vmatprep.subr.bf16.mxu0 0
        %2157 = vmatpush1.bf16.msra.mxu0 0
        %2158 = vmatprep.subr.bf16.mxu0 0
        %2159 = vmatpush1.bf16.msra.mxu0 0
        %2160 = vmatprep.subr.bf16.mxu0 0
        %2161 = vmatpush1.bf16.msra.mxu0 0
        %2162 = vmatprep.subr.bf16.mxu0 0
        %2163 = vmatpush1.bf16.msra.mxu0 0
        %2164 = vmatprep.subr.bf16.mxu0 0
        %2165 = vmatpush1.bf16.msra.mxu0 0
        %2166 = vmatprep.subr.bf16.mxu0 0
        %2167 = vmatpush1.bf16.msra.mxu0 0
        %2168 = vmatprep.subr.bf16.mxu0 0
        %2169 = vmatpush1.bf16.msra.mxu0 0
        %2170 = vmatprep.subr.bf16.mxu0 0
        %2171 = vmatpush1.bf16.msra.mxu0 %v2154
        %2172 = vmatprep.subr.bf16.mxu0 0
        %2173 = vmatpush2.bf16.msra.mxu0 0
        %2174 = vmatprep.subr.bf16.mxu0 0
        %2175 = vmatpush2.bf16.msra.mxu0 0
        %2176 = vmatprep.subr.bf16.mxu0 0
        %2177 = vmatpush2.bf16.msra.mxu0 0
        %2178 = vmatprep.subr.bf16.mxu0 0
        %2179 = vmatpush2.bf16.msra.mxu0 0
        %2180 = vmatprep.subr.bf16.mxu0 0
        %2181 = vmatpush2.bf16.msra.mxu0 0
        %2182 = vmatprep.subr.bf16.mxu0 0
        %2183 = vmatpush2.bf16.msra.mxu0 0
        %2184 = vmatprep.subr.bf16.mxu0 0
        %2185 = vmatpush2.bf16.msra.mxu0 0
        %2186 = vmatprep.subr.bf16.mxu0 0
        %2187 = vmatpush2.bf16.msra.mxu0 0
        %2188 = vmatprep.mubr.bf16.mxu0 0
        %2189 = vmatmul.mubr.bf16.gmra.mxu0 %v2151
        %v2190 = vpop.f32.mrf.mxu0
        %v2191 = vadd.f32 0.0, %v2190
        %v2192 = vpop.f32.mrf.mxu0
        %v2193 = vpop.f32.mrf.mxu0
        %v2194 = vpop.f32.mrf.mxu0
        %2195 = vdwg.mxu0
        %v2197 = vsel %vm1678, %v2098, 0
        %v2200 = vsel %vm1914, %v2102, 0
        %2202 = vmatprep.subr.bf16.mxu0 0
        %2203 = vmatpush1.bf16.msra.mxu0 0
        %2204 = vmatprep.subr.bf16.mxu0 0
        %2205 = vmatpush1.bf16.msra.mxu0 0
        %2206 = vmatprep.subr.bf16.mxu0 0
        %2207 = vmatpush1.bf16.msra.mxu0 0
        %2208 = vmatprep.subr.bf16.mxu0 0
        %2209 = vmatpush1.bf16.msra.mxu0 0
        %2210 = vmatprep.subr.bf16.mxu0 0
        %2211 = vmatpush1.bf16.msra.mxu0 0
        %2212 = vmatprep.subr.bf16.mxu0 0
        %2213 = vmatpush1.bf16.msra.mxu0 0
        %2214 = vmatprep.subr.bf16.mxu0 0
        %2215 = vmatpush1.bf16.msra.mxu0 0
        %2216 = vmatprep.subr.bf16.mxu0 0
        %2217 = vmatpush1.bf16.msra.mxu0 %v2200
        %2218 = vmatprep.subr.bf16.mxu0 0
        %2219 = vmatpush2.bf16.msra.mxu0 0
        %2220 = vmatprep.subr.bf16.mxu0 0
        %2221 = vmatpush2.bf16.msra.mxu0 0
        %2222 = vmatprep.subr.bf16.mxu0 0
        %2223 = vmatpush2.bf16.msra.mxu0 0
        %2224 = vmatprep.subr.bf16.mxu0 0
        %2225 = vmatpush2.bf16.msra.mxu0 0
        %2226 = vmatprep.subr.bf16.mxu0 0
        %2227 = vmatpush2.bf16.msra.mxu0 0
        %2228 = vmatprep.subr.bf16.mxu0 0
        %2229 = vmatpush2.bf16.msra.mxu0 0
        %2230 = vmatprep.subr.bf16.mxu0 0
        %2231 = vmatpush2.bf16.msra.mxu0 0
        %2232 = vmatprep.subr.bf16.mxu0 0
        %2233 = vmatpush2.bf16.msra.mxu0 0
        %2234 = vmatprep.mubr.bf16.mxu0 0
        %2235 = vmatmul.mubr.bf16.gmra.mxu0 %v2197
        %v2236 = vpop.f32.mrf.mxu0
        %v2237 = vadd.f32 0.0, %v2236
        %v2238 = vpop.f32.mrf.mxu0
        %v2239 = vpop.f32.mrf.mxu0
        %v2240 = vpop.f32.mrf.mxu0
        %2241 = vdwg.mxu0
        %v2243 = vsel %vm1678, %v2099, 0
        %v2246 = vsel %vm1914, %v2103, 0
        %2248 = vmatprep.subr.bf16.mxu0 0
        %2249 = vmatpush1.bf16.msra.mxu0 0
        %2250 = vmatprep.subr.bf16.mxu0 0
        %2251 = vmatpush1.bf16.msra.mxu0 0
        %2252 = vmatprep.subr.bf16.mxu0 0
        %2253 = vmatpush1.bf16.msra.mxu0 0
        %2254 = vmatprep.subr.bf16.mxu0 0
        %2255 = vmatpush1.bf16.msra.mxu0 0
        %2256 = vmatprep.subr.bf16.mxu0 0
        %2257 = vmatpush1.bf16.msra.mxu0 0
        %2258 = vmatprep.subr.bf16.mxu0 0
        %2259 = vmatpush1.bf16.msra.mxu0 0
        %2260 = vmatprep.subr.bf16.mxu0 0
        %2261 = vmatpush1.bf16.msra.mxu0 0
        %2262 = vmatprep.subr.bf16.mxu0 0
        %2263 = vmatpush1.bf16.msra.mxu0 %v2246
        %2264 = vmatprep.subr.bf16.mxu0 0
        %2265 = vmatpush2.bf16.msra.mxu0 0
        %2266 = vmatprep.subr.bf16.mxu0 0
        %2267 = vmatpush2.bf16.msra.mxu0 0
        %2268 = vmatprep.subr.bf16.mxu0 0
        %2269 = vmatpush2.bf16.msra.mxu0 0
        %2270 = vmatprep.subr.bf16.mxu0 0
        %2271 = vmatpush2.bf16.msra.mxu0 0
        %2272 = vmatprep.subr.bf16.mxu0 0
        %2273 = vmatpush2.bf16.msra.mxu0 0
        %2274 = vmatprep.subr.bf16.mxu0 0
        %2275 = vmatpush2.bf16.msra.mxu0 0
        %2276 = vmatprep.subr.bf16.mxu0 0
        %2277 = vmatpush2.bf16.msra.mxu0 0
        %2278 = vmatprep.subr.bf16.mxu0 0
        %2279 = vmatpush2.bf16.msra.mxu0 0
        %2280 = vmatprep.mubr.bf16.mxu0 0
        %2281 = vmatmul.mubr.bf16.gmra.mxu0 %v2243
        %v2282 = vpop.f32.mrf.mxu0
        %v2283 = vadd.f32 0.0, %v2282
        %v2284 = vpop.f32.mrf.mxu0
        %v2285 = vpop.f32.mrf.mxu0
        %v2286 = vpop.f32.mrf.mxu0
        %2287 = vdwg.mxu0
        %v2288 = vsel %vm495, %v2145, 0.0
        %v2289 = vsel %vm495, %v2191, 0.0
        %v2290 = vadd.f32 %v2288, %v2289
        %v2291 = vsel %vm495, %v2237, 0.0
        %v2292 = vadd.f32 %v2290, %v2291
        %v2293 = vsel %vm495, %v2283, 0.0
        %v2294 = vadd.f32 %v2292, %v2293
        %v2295 = vadd.f32 %v478, %v2294
        %v2296 = vmul.f32 %v2295, %v2295
        %v2297 = vsel %vm495, %v2296, 0.0
        %2298 = vadd.xlane.f32.xlu0 %v2297
        %v2299 = vpop.xlane.xlu0 %2298
        %v2300 = vmul.f32 %v2299, %v499
        %v2301 = vadd.f32 %v2300, 1e-06
        %v2302 = vrsqrt.pop %v2301
        %v2303 = vmul.f32 %v2295, %v2302
        %v2304 = vld [vmem:[%s7] sm:$0x1]
        %v2306 = vlaneseq
        %v2307 = vshrl.u32 %v2306, 7
        %v2308 = vsub.s32 0, %v2307
        %v2309 = vrot.slane %v2304, %v2308
        %v2311 = vmul.f32 %v2303, %v2309
        %v2312 = vpack.c.bf16 %v2311, %v2311
        %v2313 = vld [vmem:[#allocation11] sm:$0xf]
        %v2314 = vld [vmem:[#allocation11 + $0x4] sm:$0xf]
        %v2315 = vld [vmem:[#allocation11 + $0x8] sm:$0xf]
        %v2316 = vld [vmem:[#allocation11 + $0xc] sm:$0xf]
        %v2321 = vunpack.c.l.b16 %v2313
        %v2322 = vunpack.c.l.b16 %v2314
        %v2323 = vunpack.c.l.b16 %v2315
        %v2324 = vunpack.c.l.b16 %v2316
        %v2325 = vpack.c.b16 %v2322, %v2321
        %v2326 = vpack.c.b16 %v2324, %v2323
        %v2330 = vsel %vm495, %v2312, 0
        %2332 = vmatprep.subr.bf16.mxu0 0
        %2333 = vmatpush1.bf16.msra.mxu0 0
        %2334 = vmatprep.subr.bf16.mxu0 0
        %2335 = vmatpush1.bf16.msra.mxu0 0
        %2336 = vmatprep.subr.bf16.mxu0 0
        %2337 = vmatpush1.bf16.msra.mxu0 0
        %2338 = vmatprep.subr.bf16.mxu0 0
        %2339 = vmatpush1.bf16.msra.mxu0 0
        %2340 = vmatprep.subr.bf16.mxu0 0
        %2341 = vmatpush1.bf16.msra.mxu0 0
        %2342 = vmatprep.subr.bf16.mxu0 0
        %2343 = vmatpush1.bf16.msra.mxu0 0
        %2344 = vmatprep.subr.bf16.mxu0 0
        %2345 = vmatpush1.bf16.msra.mxu0 %v2326
        %2346 = vmatprep.subr.bf16.mxu0 0
        %2347 = vmatpush1.bf16.msra.mxu0 %v2325
        %2348 = vmatprep.subr.bf16.mxu0 0
        %2349 = vmatpush2.bf16.msra.mxu0 0
        %2350 = vmatprep.subr.bf16.mxu0 0
        %2351 = vmatpush2.bf16.msra.mxu0 0
        %2352 = vmatprep.subr.bf16.mxu0 0
        %2353 = vmatpush2.bf16.msra.mxu0 0
        %2354 = vmatprep.subr.bf16.mxu0 0
        %2355 = vmatpush2.bf16.msra.mxu0 0
        %2356 = vmatprep.subr.bf16.mxu0 0
        %2357 = vmatpush2.bf16.msra.mxu0 0
        %2358 = vmatprep.subr.bf16.mxu0 0
        %2359 = vmatpush2.bf16.msra.mxu0 0
        %2360 = vmatprep.subr.bf16.mxu0 0
        %2361 = vmatpush2.bf16.msra.mxu0 0
        %2362 = vmatprep.subr.bf16.mxu0 0
        %2363 = vmatpush2.bf16.msra.mxu0 0
        %2364 = vmatprep.mubr.bf16.mxu0 0
        %2365 = vmatmul.mubr.bf16.gmra.mxu0 %v2330
        %v2366 = vpop.f32.mrf.mxu0
        %v2367 = vadd.f32 0.0, %v2366
        %v2368 = vpop.f32.mrf.mxu0
        %v2369 = vpop.f32.mrf.mxu0
        %v2370 = vpop.f32.mrf.mxu0
        %2371 = vdwg.mxu0
        %v2372 = vxor.u32 %v2367, 2147483648
        %v2373 = vmul.f32 %v2372, 1.442695
        %v2374 = vpow.pop %v2373
        %v2375 = vadd.f32 %v2374, 1.0
        %v2376 = vrcp.pop %v2375
        %v2377 = vmul.f32 1.0, %v2376
        %v2378 = vmul.f32 %v2367, %v2377
        %2380 = vrot.lane.b32.xlu0 %v2367, 64
        %v2381 = vpop.permute.xlu0 %2380
        %v2383 = vmul.f32 %v2378, %v2381
        %v2384 = vpack.c.bf16 %v2383, %v2383
        %v2385 = vld [vmem:[#allocation13] sm:$0xf]
        %v2386 = vld [vmem:[#allocation13 + $0x4] sm:$0xf]
        %v2387 = vld [vmem:[#allocation13 + $0x8] sm:$0xf]
        %v2388 = vld [vmem:[#allocation13 + $0xc] sm:$0xf]
        %v2389 = vld [vmem:[#allocation13 + $0x10] sm:$0xf]
        %v2390 = vld [vmem:[#allocation13 + $0x14] sm:$0xf]
        %v2391 = vld [vmem:[#allocation13 + $0x18] sm:$0xf]
        %v2392 = vld [vmem:[#allocation13 + $0x1c] sm:$0xf]
        %v2401 = vunpack.c.l.b16 %v2385
        %v2402 = vunpack.c.l.b16 %v2386
        %v2403 = vunpack.c.l.b16 %v2387
        %v2404 = vunpack.c.l.b16 %v2388
        %v2405 = vunpack.c.l.b16 %v2389
        %v2406 = vunpack.c.l.b16 %v2390
        %v2407 = vunpack.c.l.b16 %v2391
        %v2408 = vunpack.c.l.b16 %v2392
        %v2409 = vpack.c.b16 %v2402, %v2401
        %v2410 = vpack.c.b16 %v2404, %v2403
        %v2411 = vpack.c.b16 %v2406, %v2405
        %v2412 = vpack.c.b16 %v2408, %v2407
        %vm2417 = vcmask 523264
        %v2419 = vsel %vm2417, %v2384, 0
        %2421 = vmatprep.subr.bf16.mxu0 0
        %2422 = vmatpush1.bf16.msra.mxu0 0
        %2423 = vmatprep.subr.bf16.mxu0 0
        %2424 = vmatpush1.bf16.msra.mxu0 0
        %2425 = vmatprep.subr.bf16.mxu0 0
        %2426 = vmatpush1.bf16.msra.mxu0 0
        %2427 = vmatprep.subr.bf16.mxu0 0
        %2428 = vmatpush1.bf16.msra.mxu0 0
        %2429 = vmatprep.subr.bf16.mxu0 0
        %2430 = vmatpush1.bf16.msra.mxu0 %v2412
        %2431 = vmatprep.subr.bf16.mxu0 0
        %2432 = vmatpush1.bf16.msra.mxu0 %v2411
        %2433 = vmatprep.subr.bf16.mxu0 0
        %2434 = vmatpush1.bf16.msra.mxu0 %v2410
        %2435 = vmatprep.subr.bf16.mxu0 0
        %2436 = vmatpush1.bf16.msra.mxu0 %v2409
        %2437 = vmatprep.subr.bf16.mxu0 0
        %2438 = vmatpush2.bf16.msra.mxu0 0
        %2439 = vmatprep.subr.bf16.mxu0 0
        %2440 = vmatpush2.bf16.msra.mxu0 0
        %2441 = vmatprep.subr.bf16.mxu0 0
        %2442 = vmatpush2.bf16.msra.mxu0 0
        %2443 = vmatprep.subr.bf16.mxu0 0
        %2444 = vmatpush2.bf16.msra.mxu0 0
        %2445 = vmatprep.subr.bf16.mxu0 0
        %2446 = vmatpush2.bf16.msra.mxu0 0
        %2447 = vmatprep.subr.bf16.mxu0 0
        %2448 = vmatpush2.bf16.msra.mxu0 0
        %2449 = vmatprep.subr.bf16.mxu0 0
        %2450 = vmatpush2.bf16.msra.mxu0 0
        %2451 = vmatprep.subr.bf16.mxu0 0
        %2452 = vmatpush2.bf16.msra.mxu0 0
        %2453 = vmatprep.mubr.bf16.mxu0 0
        %2454 = vmatmul.mubr.bf16.gmra.mxu0 %v2419
        %v2455 = vpop.f32.mrf.mxu0
        %v2456 = vadd.f32 0.0, %v2455
        %v2457 = vpop.f32.mrf.mxu0
        %v2458 = vpop.f32.mrf.mxu0
        %v2459 = vpop.f32.mrf.mxu0
        %2460 = vdwg.mxu0
        %v2461 = vadd.f32 %v2295, %v2456
        %2462 = vst.msk [vmem:[%s476] sm:$0xff] %vm495, %v2461
        %s2463 = sand.u32 %s260, 1
        %s2464 = scalar_lea.sflag [#allocation4], %s2463
        %s2465 = sand.u32 %s260, 1
        %s2466 = smul.addr %s2465, 8
        %s2467 = scalar_lea.vmem [#allocation14], %s2466
        // Predicated region
        $region89: #{_lambda_.1} parent=59 // pred_check
          %p2468 = pneg %p270
        $region90: #{_lambda_.1} parent=59 // pred_check_branch
          %2470 = sbr.rel (%p2468) target = $region92
        $region91: #{_lambda_.1} parent=59 // pred_region
          %s2472 = ssub.s32 128, 128
          %2473 = vsyncadd %s2464, %s2472
          %s2474 = smul.addr %s32, 128
          %s2475 = scalar_lea.hbm %s10, %s2474
          %s2477 = sshll.u32 %s2467, 4
          %s2478 = int_to_ptr.vmem [resolvable:$true] %s2477
          %2480 = dma.vmem_to_hbm [thread:$0]  %s2478, 128, %s2475, %s2464
        $region92: #{_lambda_.1} parent=59 // pred_fallthru
          _
      $region60: #{_lambda_.1} parent=5 // pred_fallthru
        _
      %p2481 = scmp.le.s32.totalorder 2, %s27
      // Predicated region
      $region93: #{_lambda_.1} parent=5 // pred_check
        %p2482 = pneg %p2481
      $region94: #{_lambda_.1} parent=5 // pred_check_branch
        %2484 = sbr.rel (%p2482) target = $region96
      $region95: #{_lambda_.1} parent=5 // pred_region
        %s2485 = ssub.s32 %s27, 2
        // Predicated region
        $region97: #{_lambda_.1} parent=95 // pred_check
          %p2486 = pneg %p276
        $region98: #{_lambda_.1} parent=95 // pred_check_branch
          %2488 = sbr.rel (%p2486) target = $region100
        $region99: #{_lambda_.1} parent=95 // pred_region
          %s2489 = sand.u32 %s261, 1
          %s2490 = scalar_lea.sflag [#allocation4], %s2489
          %s2491 = sand.u32 %s261, 1
          %s2492 = smul.addr %s2491, 8
          %s2493 = scalar_lea.vmem [#allocation14], %s2492
          %2494 = dma.done %s2490, 128
        $region100: #{_lambda_.1} parent=95 // pred_fallthru
          _
      $region96: #{_lambda_.1} parent=5 // pred_fallthru
        _
    $region6: #{_lambda_.1} parent=1 // loop_footer
      %s31 = sadd.s32 1, %s27
    $region7: #{_lambda_.1} parent=1 // loop_footer_branch
      %26 = sbr.rel target = $region3
    $region8: #{_lambda_.1} parent=1 // loop_exit
      _
    %2495 = vsyncpa [#allocation3], 1
    %s2496 = scalar_lea.sflag [#allocation3], 1
    %2497 = vsyncpa %s2496, 1
    %2498 = vsyncpa [#allocation6], 1
    %s2499 = scalar_lea.sflag [#allocation6], 1
    %2500 = vsyncpa %s2499, 1
    %2501 = vsyncpa [#allocation9], 1
    %2502 = vsyncpa [#allocation12], 1
    %2503 = vsyncpa [#allocation4], 1
    %s2504 = scalar_lea.sflag [#allocation4], 1
    %2505 = vsyncpa %s2504, 1

</llo_original>
